<compile_context>
chip_gen: v7x
topology: tpu7x:2x2x1
jax: 0.10.0
libtpu: 0.0.40
codegen_flags: <defaults>
</compile_context>

<pallas_src>
import functools

import jax
import jax.numpy as jnp
from jax.experimental import pallas as pl
from jax.experimental.pallas import tpu as pltpu


LANE = 128   # vreg lane width (feature-dim padding target)
SUBLANE = 8  # f32 sublane count (batch-dim padding target)


def _round_up(n: int, m: int) -> int:
    return (n + m - 1) // m * m


def _pad2(a, rows: int, cols: int):
    r, c = a.shape
    return jnp.pad(a, ((0, rows - r), (0, cols - c)))


def _full_spec(shape):
    return pl.BlockSpec(shape, lambda i: (0,) * len(shape))


# ----------------------------- Pallas kernel ------------------------------- #

def _run_mlp(h, refs, i, n_hidden, mask, inv_n, alpha, eps):
    """One MLP head: n_hidden x (Linear -> BN(batch stats) -> LeakyReLU) -> Linear.

    Consumes refs[i:]; returns (padded f32 output, next ref index).
    Hidden Linear bias is omitted: exactly cancelled by the BN mean
    subtraction (exact only while BN immediately follows the Linear).
    BN statistics use only the valid batch rows (row `mask`), so zero-padded
    batch rows never pollute mean/var.
    """
    for _ in range(n_hidden):
        w_ref, g_ref, beta_ref = refs[i], refs[i + 1], refs[i + 2]
        i += 3
        # bf16 MXU operands, f32 accumulation.
        y = jnp.dot(h.astype(jnp.bfloat16), w_ref[...],
                    preferred_element_type=jnp.float32)
        mean = jnp.sum(y * mask, axis=0, keepdims=True) * inv_n
        centered = y - mean
        var = jnp.sum((centered * centered) * mask, axis=0, keepdims=True) * inv_n
        # Reassociated BN affine: row-width rsqrt*gamma, then one (B,F) multiply.
        scale = jax.lax.rsqrt(var + eps) * g_ref[...]
        z = centered * scale + beta_ref[...]
        # LeakyReLU (alpha < 1): mul + max.
        h = jnp.maximum(z, alpha * z)
    w_ref, b_ref = refs[i], refs[i + 1]
    i += 2
    y = jnp.dot(h.astype(jnp.bfloat16), w_ref[...],
                preferred_element_type=jnp.float32) + b_ref[...]
    return y, i


def _generator_mlps_kernel(*refs, n_valid, n_hidden, alpha, eps):
    """Fused feature_generator -> scalar_generator chain + CPW dense head.

    refs = [x] + feat_params + scal_params + dense_params
           + [features_out, sf_out, dense_out]
    All shapes lane-padded to multiples of 128 by the wrapper; padded feature
    columns carry zeros end-to-end (gamma/beta/bias zero-padded). Batch padded
    to a sublane multiple; padded rows excluded from BN stats via `mask`.
    """
    x_ref = refs[0]
    feat_out, sf_out, dense_out = refs[-3], refs[-2], refs[-1]

    bp = x_ref.shape[0]
    row = jax.lax.broadcasted_iota(jnp.int32, (bp, 1), 0)
    mask = (row < n_valid).astype(jnp.float32)
    inv_n = jnp.float32(1.0 / n_valid)

    x = x_ref[...]
    feats, i = _run_mlp(x, refs, 1, n_hidden[0], mask, inv_n, alpha, eps)
    feat_out[...] = feats.astype(feat_out.dtype)
    # `features` stays resident; feeds the scalar head without touching HBM.
    sf, i = _run_mlp(feats, refs, i, n_hidden[1], mask, inv_n, alpha, eps)
    sf_out[...] = sf.astype(sf_out.dtype)
    dense, i = _run_mlp(x, refs, i, n_hidden[2], mask, inv_n, alpha, eps)
    dense_out[...] = dense.astype(dense_out.dtype)


# --------------------------- Parameter building ----------------------------- #

def init_mlp_params(key, in_features, out_features, layer_width):
    """nn.Linear default init + BatchNorm1d defaults (gamma=1, beta=0), f32."""
    in_sizes = (in_features, *layer_width)
    out_sizes = (*layer_width, out_features)
    params = []
    for idx, (f_in, f_out) in enumerate(zip(in_sizes, out_sizes)):
        key, kw, kb = jax.random.split(key, 3)
        bound = 1.0 / float(f_in) ** 0.5
        w = jax.random.uniform(kw, (f_out, f_in), jnp.float32, -bound, bound)
        b = jax.random.uniform(kb, (f_out,), jnp.float32, -bound, bound)
        layer = {"w_t": w.T, "b": b}
        if idx < len(layer_width):
            layer["gamma"] = jnp.ones((f_out,), jnp.float32)
            layer["beta"] = jnp.zeros((f_out,), jnp.float32)
        params.append(layer)
    return params


def pad_mlp_params(params):
    """Pre-pad one MLP's params to lane multiples, ONCE (not per forward call).

    Weights are stored bf16 (halves DMA bytes, native MXU path); gamma/beta/b
    stay f32. NOTE: gamma/beta MUST be zero-padded so padded lanes emerge as
    exactly 0 from BN (centered=0 * gamma=0 + beta=0) — do not pad gamma with 1.
    """
    padded = []
    prev_p = _round_up(params[0]["w_t"].shape[0], LANE)
    for layer in params:
        out_p = _round_up(layer["w_t"].shape[1], LANE)
        entry = {"w_t": _pad2(layer["w_t"], prev_p, out_p).astype(jnp.bfloat16)}
        if "gamma" in layer:
            entry["gamma"] = _pad2(layer["gamma"].reshape(1, -1), 1, out_p)
            entry["beta"] = _pad2(layer["beta"].reshape(1, -1), 1, out_p)
        else:
            entry["b"] = _pad2(layer["b"].reshape(1, -1), 1, out_p)
        padded.append(entry)
        prev_p = out_p
    return padded


# ------------------------------- Wrapper ------------------------------------ #

def build_generator_mlps(params_feat, params_scal, params_dense,
                         *, alpha: float = 0.2, eps: float = 1e-5):
    """Pre-pads all parameters once and returns a jitted forward(combined)
    running all three Generator MLP heads in one fused pallas_call."""
    heads = [params_feat, params_scal, params_dense]
    padded_heads = [pad_mlp_params(p) for p in heads]
    n_hidden = tuple(len(p) - 1 for p in heads)
    out_dims = tuple(p[-1]["w_t"].shape[1] for p in heads)
    out_dims_p = tuple(_round_up(d, LANE) for d in out_dims)
    f_in = params_feat[0]["w_t"].shape[0]
    f_in_p = _round_up(f_in, LANE)
    assert params_dense[0]["w_t"].shape[0] == f_in
    assert params_scal[0]["w_t"].shape[0] == out_dims[0]

    # Flatten pre-padded params into kernel argument order (done once).
    flat_params, flat_specs = [], []
    for head in padded_heads:
        for layer in head:
            keys = ("w_t", "gamma", "beta") if "gamma" in layer else ("w_t", "b")
            for k in keys:
                flat_params.append(layer[k])
                flat_specs.append(_full_spec(layer[k].shape))

    def forward(combined):
        batch, fi = combined.shape
        assert fi == f_in
        bp = _round_up(batch, SUBLANE)
        # Only the activation gets padded per call.
        x = jnp.pad(combined.astype(jnp.float32),
                    ((0, bp - batch), (0, f_in_p - fi)))

        kernel = functools.partial(
            _generator_mlps_kernel,
            n_valid=batch, n_hidden=n_hidden, alpha=alpha, eps=eps)

        out_shapes = tuple(jax.ShapeDtypeStruct((bp, dp), jnp.float32)
                           for dp in out_dims_p)
        out_specs = tuple(_full_spec((bp, dp)) for dp in out_dims_p)

        feats_p, sf_p, dense_p = pl.pallas_call(
            kernel,
            out_shape=out_shapes,
            grid=(1,),
            in_specs=[_full_spec((bp, f_in_p))] + flat_specs,
            out_specs=out_specs,
            compiler_params=pltpu.CompilerParams(
                dimension_semantics=("arbitrary",)),
        )(x, *flat_params)

        return (feats_p[:batch, :out_dims[0]],
                sf_p[:batch, :out_dims[1]],
                dense_p[:batch, :out_dims[2]])

    return jax.jit(forward)


# ------------------------------ Reference ------------------------------------ #

def mlp_reference(x, params, *, alpha=0.2, eps=1e-5):
    """Pure-JAX reference (PyTorch training-mode BN semantics). Weights routed
    through bf16 exactly like the kernel, f32 accumulation. Hidden-layer bias
    kept — it cancels in BN, so results match the bias-free kernel."""
    h = x.astype(jnp.float32)
    for layer in params[:-1]:
        y = jnp.dot(h.astype(jnp.bfloat16), layer["w_t"].astype(jnp.bfloat16),
                    preferred_element_type=jnp.float32) + layer["b"]
        mean = jnp.mean(y, axis=0, keepdims=True)
        var = jnp.mean((y - mean) ** 2, axis=0, keepdims=True)
        y = (y - mean) * jax.lax.rsqrt(var + eps) * layer["gamma"] + layer["beta"]
        h = jnp.where(y >= 0.0, y, alpha * y)
    last = params[-1]
    return jnp.dot(h.astype(jnp.bfloat16), last["w_t"].astype(jnp.bfloat16),
                   preferred_element_type=jnp.float32) + last["b"]


# --------------------------------- Main -------------------------------------- #

if __name__ == "__main__":
    key = jax.random.PRNGKey(0)
    kc, kz, kcond, kp1, kp2, kp3 = jax.random.split(key, 6)

    # Small-scale stand-ins for the Generator's inputs / MLP heads.
    latent_dim, noise_dim, num_conds = 3, 4, 2
    total_in = latent_dim + noise_dim + num_conds      # 9
    m_features = 32
    in_chnl, in_width = 32, 4                          # CPW dense out = 128
    batch = 8

    c = jax.random.uniform(kc, (batch, latent_dim), jnp.float32)
    z = 0.5 * jax.random.normal(kz, (batch, noise_dim), jnp.float32)
    conds = jax.random.normal(kcond, (batch, num_conds), jnp.float32)
    # Normalizer.normalize (min=-1, max=1, eps=1e-7) — elementwise prep.
    conds_n = (conds - (-1.0)) / (1.0 - (-1.0) + 1e-7)
    combined = jnp.concatenate([c, z, conds_n], axis=1)   # (8, 9)

    # feature_generator: MLP(total_in, m_features, (64,))
    # scalar_generator : MLP(m_features, 1, (16, 16))
    # CPW dense        : MLP(total_in, in_chnl*in_width, (64,))
    p_feat = init_mlp_params(kp1, total_in, m_features, (64,))
    p_scal = init_mlp_params(kp2, m_features, 1, (16, 16))
    p_dense = init_mlp_params(kp3, total_in, in_chnl * in_width, (64,))

    fwd = build_generator_mlps(p_feat, p_scal, p_dense)
    features, sf, dense_out = jax.block_until_ready(fwd(combined))

    assert features.shape == (batch, m_features)
    assert sf.shape == (batch, 1)
    assert dense_out.shape == (batch, in_chnl * in_width)

    ref_feat = mlp_reference(combined, p_feat)
    ref_sf = mlp_reference(ref_feat, p_scal)
    ref_dense = mlp_reference(combined, p_dense)

    for out, ref in ((features, ref_feat), (sf, ref_sf), (dense_out, ref_dense)):
        err = float(jnp.max(jnp.abs(out - ref)))
        assert jnp.allclose(out, ref, atol=2e-3, rtol=2e-3), err

    print("KERNEL_OK")
</pallas_src>

<mosaic_0001>
module attributes {stable_mosaic.version = 11 : i64} {
  func.func @_generator_mlps_kernel(%arg0: i32, %arg1: memref<8x128xf32, #tpu.memory_space<vmem>>, %arg2: memref<128x128xbf16, #tpu.memory_space<vmem>>, %arg3: memref<1x128xf32, #tpu.memory_space<vmem>>, %arg4: memref<1x128xf32, #tpu.memory_space<vmem>>, %arg5: memref<128x128xbf16, #tpu.memory_space<vmem>>, %arg6: memref<1x128xf32, #tpu.memory_space<vmem>>, %arg7: memref<128x128xbf16, #tpu.memory_space<vmem>>, %arg8: memref<1x128xf32, #tpu.memory_space<vmem>>, %arg9: memref<1x128xf32, #tpu.memory_space<vmem>>, %arg10: memref<128x128xbf16, #tpu.memory_space<vmem>>, %arg11: memref<1x128xf32, #tpu.memory_space<vmem>>, %arg12: memref<1x128xf32, #tpu.memory_space<vmem>>, %arg13: memref<128x128xbf16, #tpu.memory_space<vmem>>, %arg14: memref<1x128xf32, #tpu.memory_space<vmem>>, %arg15: memref<128x128xbf16, #tpu.memory_space<vmem>>, %arg16: memref<1x128xf32, #tpu.memory_space<vmem>>, %arg17: memref<1x128xf32, #tpu.memory_space<vmem>>, %arg18: memref<128x128xbf16, #tpu.memory_space<vmem>>, %arg19: memref<1x128xf32, #tpu.memory_space<vmem>>, %arg20: memref<8x128xf32, #tpu.memory_space<vmem>>, %arg21: memref<8x128xf32, #tpu.memory_space<vmem>>, %arg22: memref<8x128xf32, #tpu.memory_space<vmem>>) attributes {dimension_semantics = [#tpu.dimension_semantics<arbitrary>], iteration_bounds = array<i64: 1>, scalar_prefetch = 0 : i64, scratch_operands = 0 : i64, tpu.core_type = #tpu.core_type<tc>, window_params = [{pipeline_mode = #tpu.pipeline_mode<synchronous>, transform_indices = @transform_0, window_bounds = array<i64: 8, 128>}, {pipeline_mode = #tpu.pipeline_mode<synchronous>, transform_indices = @transform_1, window_bounds = array<i64: 128, 128>}, {pipeline_mode = #tpu.pipeline_mode<synchronous>, transform_indices = @transform_2, window_bounds = array<i64: 1, 128>}, {pipeline_mode = #tpu.pipeline_mode<synchronous>, transform_indices = @transform_3, window_bounds = array<i64: 1, 128>}, {pipeline_mode = #tpu.pipeline_mode<synchronous>, transform_indices = @transform_4, window_bounds = array<i64: 128, 128>}, {pipeline_mode = #tpu.pipeline_mode<synchronous>, transform_indices = @transform_5, window_bounds = array<i64: 1, 128>}, {pipeline_mode = #tpu.pipeline_mode<synchronous>, transform_indices = @transform_6, window_bounds = array<i64: 128, 128>}, {pipeline_mode = #tpu.pipeline_mode<synchronous>, transform_indices = @transform_7, window_bounds = array<i64: 1, 128>}, {pipeline_mode = #tpu.pipeline_mode<synchronous>, transform_indices = @transform_8, window_bounds = array<i64: 1, 128>}, {pipeline_mode = #tpu.pipeline_mode<synchronous>, transform_indices = @transform_9, window_bounds = array<i64: 128, 128>}, {pipeline_mode = #tpu.pipeline_mode<synchronous>, transform_indices = @transform_10, window_bounds = array<i64: 1, 128>}, {pipeline_mode = #tpu.pipeline_mode<synchronous>, transform_indices = @transform_11, window_bounds = array<i64: 1, 128>}, {pipeline_mode = #tpu.pipeline_mode<synchronous>, transform_indices = @transform_12, window_bounds = array<i64: 128, 128>}, {pipeline_mode = #tpu.pipeline_mode<synchronous>, transform_indices = @transform_13, window_bounds = array<i64: 1, 128>}, {pipeline_mode = #tpu.pipeline_mode<synchronous>, transform_indices = @transform_14, window_bounds = array<i64: 128, 128>}, {pipeline_mode = #tpu.pipeline_mode<synchronous>, transform_indices = @transform_15, window_bounds = array<i64: 1, 128>}, {pipeline_mode = #tpu.pipeline_mode<synchronous>, transform_indices = @transform_16, window_bounds = array<i64: 1, 128>}, {pipeline_mode = #tpu.pipeline_mode<synchronous>, transform_indices = @transform_17, window_bounds = array<i64: 128, 128>}, {pipeline_mode = #tpu.pipeline_mode<synchronous>, transform_indices = @transform_18, window_bounds = array<i64: 1, 128>}, {pipeline_mode = #tpu.pipeline_mode<synchronous>, transform_indices = @transform_19, window_bounds = array<i64: 8, 128>}, {pipeline_mode = #tpu.pipeline_mode<synchronous>, transform_indices = @transform_20, window_bounds = array<i64: 8, 128>}, {pipeline_mode = #tpu.pipeline_mode<synchronous>, transform_indices = @transform_21, window_bounds = array<i64: 8, 128>}]} {
    %0 = tpu.iota {dimensions = array<i32: 0>} : vector<8x1xi32>
    %c8_i32 = arith.constant 8 : i32
    %1 = vector.broadcast %c8_i32 : i32 to vector<8x1xi32>
    %2 = arith.cmpi slt, %0, %1 : vector<8x1xi32>
    %3 = arith.extui %2 : vector<8x1xi1> to vector<8x1xi32>
    %4 = arith.sitofp %3 : vector<8x1xi32> to vector<8x1xf32>
    %c0 = arith.constant 0 : index
    %c0_0 = arith.constant 0 : index
    %5 = vector.load %arg1[%c0, %c0_0] : memref<8x128xf32, #tpu.memory_space<vmem>>, vector<8x128xf32>
    %6 = arith.truncf %5 : vector<8x128xf32> to vector<8x128xbf16>
    %c0_1 = arith.constant 0 : index
    %c0_2 = arith.constant 0 : index
    %7 = vector.load %arg2[%c0_1, %c0_2] : memref<128x128xbf16, #tpu.memory_space<vmem>>, vector<128x128xbf16>
    %cst = arith.constant dense<0.000000e+00> : vector<8x128xf32>
    %8 = tpu.matmul %6, %7, %cst {dimension_numbers = #tpu.dot_dimension_numbers<[1], [0], [0], [1], [0, 0, 1, 1], [], []>} : vector<8x128xbf16>, vector<128x128xbf16>, vector<8x128xf32> -> vector<8x128xf32>
    %9 = vector.broadcast %4 : vector<8x1xf32> to vector<8x128xf32>
    %10 = arith.mulf %8, %9 : vector<8x128xf32>
    %cst_3 = arith.constant dense<0.000000e+00> : vector<128xf32>
    %11 = vector.multi_reduction <add>, %10, %cst_3 [0] : vector<8x128xf32> to vector<128xf32>
    %12 = vector.shape_cast %11 : vector<128xf32> to vector<1x128xf32>
    %cst_4 = arith.constant 1.250000e-01 : f32
    %13 = vector.broadcast %cst_4 : f32 to vector<1x128xf32>
    %14 = arith.mulf %12, %13 : vector<1x128xf32>
    %15 = vector.broadcast %14 : vector<1x128xf32> to vector<8x128xf32>
    %16 = arith.subf %8, %15 : vector<8x128xf32>
    %17 = arith.mulf %16, %16 : vector<8x128xf32>
    %18 = vector.broadcast %4 : vector<8x1xf32> to vector<8x128xf32>
    %19 = arith.mulf %17, %18 : vector<8x128xf32>
    %cst_5 = arith.constant dense<0.000000e+00> : vector<128xf32>
    %20 = vector.multi_reduction <add>, %19, %cst_5 [0] : vector<8x128xf32> to vector<128xf32>
    %21 = vector.shape_cast %20 : vector<128xf32> to vector<1x128xf32>
    %cst_6 = arith.constant 1.250000e-01 : f32
    %22 = vector.broadcast %cst_6 : f32 to vector<1x128xf32>
    %23 = arith.mulf %21, %22 : vector<1x128xf32>
    %cst_7 = arith.constant 9.99999974E-6 : f32
    %24 = vector.broadcast %cst_7 : f32 to vector<1x128xf32>
    %25 = arith.addf %23, %24 : vector<1x128xf32>
    %26 = math.rsqrt %25 : vector<1x128xf32>
    %c0_8 = arith.constant 0 : index
    %c0_9 = arith.constant 0 : index
    %27 = vector.load %arg3[%c0_8, %c0_9] : memref<1x128xf32, #tpu.memory_space<vmem>>, vector<1x128xf32>
    %28 = arith.mulf %26, %27 : vector<1x128xf32>
    %29 = vector.broadcast %28 : vector<1x128xf32> to vector<8x128xf32>
    %30 = arith.mulf %16, %29 : vector<8x128xf32>
    %c0_10 = arith.constant 0 : index
    %c0_11 = arith.constant 0 : index
    %31 = vector.load %arg4[%c0_10, %c0_11] : memref<1x128xf32, #tpu.memory_space<vmem>>, vector<1x128xf32>
    %32 = vector.broadcast %31 : vector<1x128xf32> to vector<8x128xf32>
    %33 = arith.addf %30, %32 : vector<8x128xf32>
    %cst_12 = arith.constant 2.000000e-01 : f32
    %34 = vector.broadcast %cst_12 : f32 to vector<8x128xf32>
    %35 = arith.mulf %34, %33 : vector<8x128xf32>
    %36 = arith.maximumf %33, %35 : vector<8x128xf32>
    %37 = arith.truncf %36 : vector<8x128xf32> to vector<8x128xbf16>
    %c0_13 = arith.constant 0 : index
    %c0_14 = arith.constant 0 : index
    %38 = vector.load %arg5[%c0_13, %c0_14] : memref<128x128xbf16, #tpu.memory_space<vmem>>, vector<128x128xbf16>
    %cst_15 = arith.constant dense<0.000000e+00> : vector<8x128xf32>
    %39 = tpu.matmul %37, %38, %cst_15 {dimension_numbers = #tpu.dot_dimension_numbers<[1], [0], [0], [1], [0, 0, 1, 1], [], []>} : vector<8x128xbf16>, vector<128x128xbf16>, vector<8x128xf32> -> vector<8x128xf32>
    %c0_16 = arith.constant 0 : index
    %c0_17 = arith.constant 0 : index
    %40 = vector.load %arg6[%c0_16, %c0_17] : memref<1x128xf32, #tpu.memory_space<vmem>>, vector<1x128xf32>
    %41 = vector.broadcast %40 : vector<1x128xf32> to vector<8x128xf32>
    %42 = arith.addf %39, %41 : vector<8x128xf32>
    %c0_18 = arith.constant 0 : index
    %c0_19 = arith.constant 0 : index
    %43 = vector.load %arg20[%c0_18, %c0_19] : memref<8x128xf32, #tpu.memory_space<vmem>>, vector<8x128xf32>
    tpu.vector_store %arg20[%c0_18, %c0_19], %42 {strides = array<i32>} : memref<8x128xf32, #tpu.memory_space<vmem>>, vector<8x128xf32>,
    %44 = arith.truncf %42 : vector<8x128xf32> to vector<8x128xbf16>
    %c0_20 = arith.constant 0 : index
    %c0_21 = arith.constant 0 : index
    %45 = vector.load %arg7[%c0_20, %c0_21] : memref<128x128xbf16, #tpu.memory_space<vmem>>, vector<128x128xbf16>
    %cst_22 = arith.constant dense<0.000000e+00> : vector<8x128xf32>
    %46 = tpu.matmul %44, %45, %cst_22 {dimension_numbers = #tpu.dot_dimension_numbers<[1], [0], [0], [1], [0, 0, 1, 1], [], []>} : vector<8x128xbf16>, vector<128x128xbf16>, vector<8x128xf32> -> vector<8x128xf32>
    %47 = vector.broadcast %4 : vector<8x1xf32> to vector<8x128xf32>
    %48 = arith.mulf %46, %47 : vector<8x128xf32>
    %cst_23 = arith.constant dense<0.000000e+00> : vector<128xf32>
    %49 = vector.multi_reduction <add>, %48, %cst_23 [0] : vector<8x128xf32> to vector<128xf32>
    %50 = vector.shape_cast %49 : vector<128xf32> to vector<1x128xf32>
    %cst_24 = arith.constant 1.250000e-01 : f32
    %51 = vector.broadcast %cst_24 : f32 to vector<1x128xf32>
    %52 = arith.mulf %50, %51 : vector<1x128xf32>
    %53 = vector.broadcast %52 : vector<1x128xf32> to vector<8x128xf32>
    %54 = arith.subf %46, %53 : vector<8x128xf32>
    %55 = arith.mulf %54, %54 : vector<8x128xf32>
    %56 = vector.broadcast %4 : vector<8x1xf32> to vector<8x128xf32>
    %57 = arith.mulf %55, %56 : vector<8x128xf32>
    %cst_25 = arith.constant dense<0.000000e+00> : vector<128xf32>
    %58 = vector.multi_reduction <add>, %57, %cst_25 [0] : vector<8x128xf32> to vector<128xf32>
    %59 = vector.shape_cast %58 : vector<128xf32> to vector<1x128xf32>
    %cst_26 = arith.constant 1.250000e-01 : f32
    %60 = vector.broadcast %cst_26 : f32 to vector<1x128xf32>
    %61 = arith.mulf %59, %60 : vector<1x128xf32>
    %cst_27 = arith.constant 9.99999974E-6 : f32
    %62 = vector.broadcast %cst_27 : f32 to vector<1x128xf32>
    %63 = arith.addf %61, %62 : vector<1x128xf32>
    %64 = math.rsqrt %63 : vector<1x128xf32>
    %c0_28 = arith.constant 0 : index
    %c0_29 = arith.constant 0 : index
    %65 = vector.load %arg8[%c0_28, %c0_29] : memref<1x128xf32, #tpu.memory_space<vmem>>, vector<1x128xf32>
    %66 = arith.mulf %64, %65 : vector<1x128xf32>
    %67 = vector.broadcast %66 : vector<1x128xf32> to vector<8x128xf32>
    %68 = arith.mulf %54, %67 : vector<8x128xf32>
    %c0_30 = arith.constant 0 : index
    %c0_31 = arith.constant 0 : index
    %69 = vector.load %arg9[%c0_30, %c0_31] : memref<1x128xf32, #tpu.memory_space<vmem>>, vector<1x128xf32>
    %70 = vector.broadcast %69 : vector<1x128xf32> to vector<8x128xf32>
    %71 = arith.addf %68, %70 : vector<8x128xf32>
    %cst_32 = arith.constant 2.000000e-01 : f32
    %72 = vector.broadcast %cst_32 : f32 to vector<8x128xf32>
    %73 = arith.mulf %72, %71 : vector<8x128xf32>
    %74 = arith.maximumf %71, %73 : vector<8x128xf32>
    %75 = arith.truncf %74 : vector<8x128xf32> to vector<8x128xbf16>
    %c0_33 = arith.constant 0 : index
    %c0_34 = arith.constant 0 : index
    %76 = vector.load %arg10[%c0_33, %c0_34] : memref<128x128xbf16, #tpu.memory_space<vmem>>, vector<128x128xbf16>
    %cst_35 = arith.constant dense<0.000000e+00> : vector<8x128xf32>
    %77 = tpu.matmul %75, %76, %cst_35 {dimension_numbers = #tpu.dot_dimension_numbers<[1], [0], [0], [1], [0, 0, 1, 1], [], []>} : vector<8x128xbf16>, vector<128x128xbf16>, vector<8x128xf32> -> vector<8x128xf32>
    %78 = vector.broadcast %4 : vector<8x1xf32> to vector<8x128xf32>
    %79 = arith.mulf %77, %78 : vector<8x128xf32>
    %cst_36 = arith.constant dense<0.000000e+00> : vector<128xf32>
    %80 = vector.multi_reduction <add>, %79, %cst_36 [0] : vector<8x128xf32> to vector<128xf32>
    %81 = vector.shape_cast %80 : vector<128xf32> to vector<1x128xf32>
    %cst_37 = arith.constant 1.250000e-01 : f32
    %82 = vector.broadcast %cst_37 : f32 to vector<1x128xf32>
    %83 = arith.mulf %81, %82 : vector<1x128xf32>
    %84 = vector.broadcast %83 : vector<1x128xf32> to vector<8x128xf32>
    %85 = arith.subf %77, %84 : vector<8x128xf32>
    %86 = arith.mulf %85, %85 : vector<8x128xf32>
    %87 = vector.broadcast %4 : vector<8x1xf32> to vector<8x128xf32>
    %88 = arith.mulf %86, %87 : vector<8x128xf32>
    %cst_38 = arith.constant dense<0.000000e+00> : vector<128xf32>
    %89 = vector.multi_reduction <add>, %88, %cst_38 [0] : vector<8x128xf32> to vector<128xf32>
    %90 = vector.shape_cast %89 : vector<128xf32> to vector<1x128xf32>
    %cst_39 = arith.constant 1.250000e-01 : f32
    %91 = vector.broadcast %cst_39 : f32 to vector<1x128xf32>
    %92 = arith.mulf %90, %91 : vector<1x128xf32>
    %cst_40 = arith.constant 9.99999974E-6 : f32
    %93 = vector.broadcast %cst_40 : f32 to vector<1x128xf32>
    %94 = arith.addf %92, %93 : vector<1x128xf32>
    %95 = math.rsqrt %94 : vector<1x128xf32>
    %c0_41 = arith.constant 0 : index
    %c0_42 = arith.constant 0 : index
    %96 = vector.load %arg11[%c0_41, %c0_42] : memref<1x128xf32, #tpu.memory_space<vmem>>, vector<1x128xf32>
    %97 = arith.mulf %95, %96 : vector<1x128xf32>
    %98 = vector.broadcast %97 : vector<1x128xf32> to vector<8x128xf32>
    %99 = arith.mulf %85, %98 : vector<8x128xf32>
    %c0_43 = arith.constant 0 : index
    %c0_44 = arith.constant 0 : index
    %100 = vector.load %arg12[%c0_43, %c0_44] : memref<1x128xf32, #tpu.memory_space<vmem>>, vector<1x128xf32>
    %101 = vector.broadcast %100 : vector<1x128xf32> to vector<8x128xf32>
    %102 = arith.addf %99, %101 : vector<8x128xf32>
    %cst_45 = arith.constant 2.000000e-01 : f32
    %103 = vector.broadcast %cst_45 : f32 to vector<8x128xf32>
    %104 = arith.mulf %103, %102 : vector<8x128xf32>
    %105 = arith.maximumf %102, %104 : vector<8x128xf32>
    %106 = arith.truncf %105 : vector<8x128xf32> to vector<8x128xbf16>
    %c0_46 = arith.constant 0 : index
    %c0_47 = arith.constant 0 : index
    %107 = vector.load %arg13[%c0_46, %c0_47] : memref<128x128xbf16, #tpu.memory_space<vmem>>, vector<128x128xbf16>
    %cst_48 = arith.constant dense<0.000000e+00> : vector<8x128xf32>
    %108 = tpu.matmul %106, %107, %cst_48 {dimension_numbers = #tpu.dot_dimension_numbers<[1], [0], [0], [1], [0, 0, 1, 1], [], []>} : vector<8x128xbf16>, vector<128x128xbf16>, vector<8x128xf32> -> vector<8x128xf32>
    %c0_49 = arith.constant 0 : index
    %c0_50 = arith.constant 0 : index
    %109 = vector.load %arg14[%c0_49, %c0_50] : memref<1x128xf32, #tpu.memory_space<vmem>>, vector<1x128xf32>
    %110 = vector.broadcast %109 : vector<1x128xf32> to vector<8x128xf32>
    %111 = arith.addf %108, %110 : vector<8x128xf32>
    %c0_51 = arith.constant 0 : index
    %c0_52 = arith.constant 0 : index
    %112 = vector.load %arg21[%c0_51, %c0_52] : memref<8x128xf32, #tpu.memory_space<vmem>>, vector<8x128xf32>
    tpu.vector_store %arg21[%c0_51, %c0_52], %111 {strides = array<i32>} : memref<8x128xf32, #tpu.memory_space<vmem>>, vector<8x128xf32>,
    %113 = arith.truncf %5 : vector<8x128xf32> to vector<8x128xbf16>
    %c0_53 = arith.constant 0 : index
    %c0_54 = arith.constant 0 : index
    %114 = vector.load %arg15[%c0_53, %c0_54] : memref<128x128xbf16, #tpu.memory_space<vmem>>, vector<128x128xbf16>
    %cst_55 = arith.constant dense<0.000000e+00> : vector<8x128xf32>
    %115 = tpu.matmul %113, %114, %cst_55 {dimension_numbers = #tpu.dot_dimension_numbers<[1], [0], [0], [1], [0, 0, 1, 1], [], []>} : vector<8x128xbf16>, vector<128x128xbf16>, vector<8x128xf32> -> vector<8x128xf32>
    %116 = vector.broadcast %4 : vector<8x1xf32> to vector<8x128xf32>
    %117 = arith.mulf %115, %116 : vector<8x128xf32>
    %cst_56 = arith.constant dense<0.000000e+00> : vector<128xf32>
    %118 = vector.multi_reduction <add>, %117, %cst_56 [0] : vector<8x128xf32> to vector<128xf32>
    %119 = vector.shape_cast %118 : vector<128xf32> to vector<1x128xf32>
    %cst_57 = arith.constant 1.250000e-01 : f32
    %120 = vector.broadcast %cst_57 : f32 to vector<1x128xf32>
    %121 = arith.mulf %119, %120 : vector<1x128xf32>
    %122 = vector.broadcast %121 : vector<1x128xf32> to vector<8x128xf32>
    %123 = arith.subf %115, %122 : vector<8x128xf32>
    %124 = arith.mulf %123, %123 : vector<8x128xf32>
    %125 = vector.broadcast %4 : vector<8x1xf32> to vector<8x128xf32>
    %126 = arith.mulf %124, %125 : vector<8x128xf32>
    %cst_58 = arith.constant dense<0.000000e+00> : vector<128xf32>
    %127 = vector.multi_reduction <add>, %126, %cst_58 [0] : vector<8x128xf32> to vector<128xf32>
    %128 = vector.shape_cast %127 : vector<128xf32> to vector<1x128xf32>
    %cst_59 = arith.constant 1.250000e-01 : f32
    %129 = vector.broadcast %cst_59 : f32 to vector<1x128xf32>
    %130 = arith.mulf %128, %129 : vector<1x128xf32>
    %cst_60 = arith.constant 9.99999974E-6 : f32
    %131 = vector.broadcast %cst_60 : f32 to vector<1x128xf32>
    %132 = arith.addf %130, %131 : vector<1x128xf32>
    %133 = math.rsqrt %132 : vector<1x128xf32>
    %c0_61 = arith.constant 0 : index
    %c0_62 = arith.constant 0 : index
    %134 = vector.load %arg16[%c0_61, %c0_62] : memref<1x128xf32, #tpu.memory_space<vmem>>, vector<1x128xf32>
    %135 = arith.mulf %133, %134 : vector<1x128xf32>
    %136 = vector.broadcast %135 : vector<1x128xf32> to vector<8x128xf32>
    %137 = arith.mulf %123, %136 : vector<8x128xf32>
    %c0_63 = arith.constant 0 : index
    %c0_64 = arith.constant 0 : index
    %138 = vector.load %arg17[%c0_63, %c0_64] : memref<1x128xf32, #tpu.memory_space<vmem>>, vector<1x128xf32>
    %139 = vector.broadcast %138 : vector<1x128xf32> to vector<8x128xf32>
    %140 = arith.addf %137, %139 : vector<8x128xf32>
    %cst_65 = arith.constant 2.000000e-01 : f32
    %141 = vector.broadcast %cst_65 : f32 to vector<8x128xf32>
    %142 = arith.mulf %141, %140 : vector<8x128xf32>
    %143 = arith.maximumf %140, %142 : vector<8x128xf32>
    %144 = arith.truncf %143 : vector<8x128xf32> to vector<8x128xbf16>
    %c0_66 = arith.constant 0 : index
    %c0_67 = arith.constant 0 : index
    %145 = vector.load %arg18[%c0_66, %c0_67] : memref<128x128xbf16, #tpu.memory_space<vmem>>, vector<128x128xbf16>
    %cst_68 = arith.constant dense<0.000000e+00> : vector<8x128xf32>
    %146 = tpu.matmul %144, %145, %cst_68 {dimension_numbers = #tpu.dot_dimension_numbers<[1], [0], [0], [1], [0, 0, 1, 1], [], []>} : vector<8x128xbf16>, vector<128x128xbf16>, vector<8x128xf32> -> vector<8x128xf32>
    %c0_69 = arith.constant 0 : index
    %c0_70 = arith.constant 0 : index
    %147 = vector.load %arg19[%c0_69, %c0_70] : memref<1x128xf32, #tpu.memory_space<vmem>>, vector<1x128xf32>
    %148 = vector.broadcast %147 : vector<1x128xf32> to vector<8x128xf32>
    %149 = arith.addf %146, %148 : vector<8x128xf32>
    %c0_71 = arith.constant 0 : index
    %c0_72 = arith.constant 0 : index
    %150 = vector.load %arg22[%c0_71, %c0_72] : memref<8x128xf32, #tpu.memory_space<vmem>>, vector<8x128xf32>
    tpu.vector_store %arg22[%c0_71, %c0_72], %149 {strides = array<i32>} : memref<8x128xf32, #tpu.memory_space<vmem>>, vector<8x128xf32>,
    return
  }
  func.func @transform_0(%arg0: i32) -> (i32, i32) {
    %c0_i32 = arith.constant 0 : i32
    %c0_i32_0 = arith.constant 0 : i32
    %c0_i32_1 = arith.constant 0 : i32
    return %c0_i32, %c0_i32_0 : i32, i32
  }
  func.func @transform_1(%arg0: i32) -> (i32, i32) {
    %c0_i32 = arith.constant 0 : i32
    %c0_i32_0 = arith.constant 0 : i32
    %c0_i32_1 = arith.constant 0 : i32
    return %c0_i32, %c0_i32_0 : i32, i32
  }
  func.func @transform_2(%arg0: i32) -> (i32, i32) {
    %c0_i32 = arith.constant 0 : i32
    %c0_i32_0 = arith.constant 0 : i32
    %c0_i32_1 = arith.constant 0 : i32
    return %c0_i32, %c0_i32_0 : i32, i32
  }
  func.func @transform_3(%arg0: i32) -> (i32, i32) {
    %c0_i32 = arith.constant 0 : i32
    %c0_i32_0 = arith.constant 0 : i32
    %c0_i32_1 = arith.constant 0 : i32
    return %c0_i32, %c0_i32_0 : i32, i32
  }
  func.func @transform_4(%arg0: i32) -> (i32, i32) {
    %c0_i32 = arith.constant 0 : i32
    %c0_i32_0 = arith.constant 0 : i32
    %c0_i32_1 = arith.constant 0 : i32
    return %c0_i32, %c0_i32_0 : i32, i32
  }
  func.func @transform_5(%arg0: i32) -> (i32, i32) {
    %c0_i32 = arith.constant 0 : i32
    %c0_i32_0 = arith.constant 0 : i32
    %c0_i32_1 = arith.constant 0 : i32
    return %c0_i32, %c0_i32_0 : i32, i32
  }
  func.func @transform_6(%arg0: i32) -> (i32, i32) {
    %c0_i32 = arith.constant 0 : i32
    %c0_i32_0 = arith.constant 0 : i32
    %c0_i32_1 = arith.constant 0 : i32
    return %c0_i32, %c0_i32_0 : i32, i32
  }
  func.func @transform_7(%arg0: i32) -> (i32, i32) {
    %c0_i32 = arith.constant 0 : i32
    %c0_i32_0 = arith.constant 0 : i32
    %c0_i32_1 = arith.constant 0 : i32
    return %c0_i32, %c0_i32_0 : i32, i32
  }
  func.func @transform_8(%arg0: i32) -> (i32, i32) {
    %c0_i32 = arith.constant 0 : i32
    %c0_i32_0 = arith.constant 0 : i32
    %c0_i32_1 = arith.constant 0 : i32
    return %c0_i32, %c0_i32_0 : i32, i32
  }
  func.func @transform_9(%arg0: i32) -> (i32, i32) {
    %c0_i32 = arith.constant 0 : i32
    %c0_i32_0 = arith.constant 0 : i32
    %c0_i32_1 = arith.constant 0 : i32
    return %c0_i32, %c0_i32_0 : i32, i32
  }
  func.func @transform_10(%arg0: i32) -> (i32, i32) {
    %c0_i32 = arith.constant 0 : i32
    %c0_i32_0 = arith.constant 0 : i32
    %c0_i32_1 = arith.constant 0 : i32
    return %c0_i32, %c0_i32_0 : i32, i32
  }
  func.func @transform_11(%arg0: i32) -> (i32, i32) {
    %c0_i32 = arith.constant 0 : i32
    %c0_i32_0 = arith.constant 0 : i32
    %c0_i32_1 = arith.constant 0 : i32
    return %c0_i32, %c0_i32_0 : i32, i32
  }
  func.func @transform_12(%arg0: i32) -> (i32, i32) {
    %c0_i32 = arith.constant 0 : i32
    %c0_i32_0 = arith.constant 0 : i32
    %c0_i32_1 = arith.constant 0 : i32
    return %c0_i32, %c0_i32_0 : i32, i32
  }
  func.func @transform_13(%arg0: i32) -> (i32, i32) {
    %c0_i32 = arith.constant 0 : i32
    %c0_i32_0 = arith.constant 0 : i32
    %c0_i32_1 = arith.constant 0 : i32
    return %c0_i32, %c0_i32_0 : i32, i32
  }
  func.func @transform_14(%arg0: i32) -> (i32, i32) {
    %c0_i32 = arith.constant 0 : i32
    %c0_i32_0 = arith.constant 0 : i32
    %c0_i32_1 = arith.constant 0 : i32
    return %c0_i32, %c0_i32_0 : i32, i32
  }
  func.func @transform_15(%arg0: i32) -> (i32, i32) {
    %c0_i32 = arith.constant 0 : i32
    %c0_i32_0 = arith.constant 0 : i32
    %c0_i32_1 = arith.constant 0 : i32
    return %c0_i32, %c0_i32_0 : i32, i32
  }
  func.func @transform_16(%arg0: i32) -> (i32, i32) {
    %c0_i32 = arith.constant 0 : i32
    %c0_i32_0 = arith.constant 0 : i32
    %c0_i32_1 = arith.constant 0 : i32
    return %c0_i32, %c0_i32_0 : i32, i32
  }
  func.func @transform_17(%arg0: i32) -> (i32, i32) {
    %c0_i32 = arith.constant 0 : i32
    %c0_i32_0 = arith.constant 0 : i32
    %c0_i32_1 = arith.constant 0 : i32
    return %c0_i32, %c0_i32_0 : i32, i32
  }
  func.func @transform_18(%arg0: i32) -> (i32, i32) {
    %c0_i32 = arith.constant 0 : i32
    %c0_i32_0 = arith.constant 0 : i32
    %c0_i32_1 = arith.constant 0 : i32
    return %c0_i32, %c0_i32_0 : i32, i32
  }
  func.func @transform_19(%arg0: i32) -> (i32, i32) {
    %c0_i32 = arith.constant 0 : i32
    %c0_i32_0 = arith.constant 0 : i32
    %c0_i32_1 = arith.constant 0 : i32
    return %c0_i32, %c0_i32_0 : i32, i32
  }
  func.func @transform_20(%arg0: i32) -> (i32, i32) {
    %c0_i32 = arith.constant 0 : i32
    %c0_i32_0 = arith.constant 0 : i32
    %c0_i32_1 = arith.constant 0 : i32
    return %c0_i32, %c0_i32_0 : i32, i32
  }
  func.func @transform_21(%arg0: i32) -> (i32, i32) {
    %c0_i32 = arith.constant 0 : i32
    %c0_i32_0 = arith.constant 0 : i32
    %c0_i32_1 = arith.constant 0 : i32
    return %c0_i32, %c0_i32_0 : i32, i32
  }
}

</mosaic_0001>

<llo_original>
// kernel: forward.1
$region0: #{forward.1}
  #allocation0 [shape = 'u32[]', space=smem, size = 0x4, offset = 0x4, fixed_abs, tag = 'smem constant byte address 0x4 - core index']
  #allocation1 [shape = 'u32[144,128]{1,0:T(1,128)}', space=vmem, size = 0x12000, scoped, tag = 'internal scratch']
  %s0 = inlined_call_operand.vmem [shape: f32[8,128], index: 0, kind: input, shape index: {}]
  %s1 = inlined_call_operand.hbm [shape: bf16[128,128], index: 1, kind: input, shape index: {}]
  %s2 = inlined_call_operand.vmem [shape: f32[1,128], index: 2, kind: input, shape index: {}, may-alias: {2,15}]
  %s3 = inlined_call_operand.vmem [shape: f32[1,128], index: 3, kind: input, shape index: {}, may-alias: {3,8,11,16}]
  %s4 = inlined_call_operand.hbm [shape: bf16[128,128], index: 4, kind: input, shape index: {}]
  %s5 = inlined_call_operand.vmem [shape: f32[1,128], index: 5, kind: input, shape index: {}]
  %s6 = inlined_call_operand.hbm [shape: bf16[128,128], index: 6, kind: input, shape index: {}]
  %s7 = inlined_call_operand.vmem [shape: f32[1,128], index: 7, kind: input, shape index: {}, may-alias: {7,10}]
  %s8 = inlined_call_operand.vmem [shape: f32[1,128], index: 8, kind: input, shape index: {}, may-alias: {3,8,11,16}]
  %s9 = inlined_call_operand.hbm [shape: bf16[128,128], index: 9, kind: input, shape index: {}]
  %s10 = inlined_call_operand.vmem [shape: f32[1,128], index: 10, kind: input, shape index: {}, may-alias: {7,10}]
  %s11 = inlined_call_operand.vmem [shape: f32[1,128], index: 11, kind: input, shape index: {}, may-alias: {3,8,11,16}]
  %s12 = inlined_call_operand.hbm [shape: bf16[128,128], index: 12, kind: input, shape index: {}]
  %s13 = inlined_call_operand.vmem [shape: f32[1,128], index: 13, kind: input, shape index: {}]
  %s14 = inlined_call_operand.hbm [shape: bf16[128,128], index: 14, kind: input, shape index: {}]
  %s15 = inlined_call_operand.vmem [shape: f32[1,128], index: 15, kind: input, shape index: {}, may-alias: {2,15}]
  %s16 = inlined_call_operand.vmem [shape: f32[1,128], index: 16, kind: input, shape index: {}, may-alias: {3,8,11,16}]
  %s17 = inlined_call_operand.vmem [shape: bf16[128,128], index: 17, kind: input, shape index: {}]
  %s18 = inlined_call_operand.vmem [shape: f32[1,128], index: 18, kind: input, shape index: {}]
  %s19 = inlined_call_operand.hbm [shape: f32[8,128], index: 19, kind: output, shape index: {0}]
  %s20 = inlined_call_operand.vmem [shape: f32[8,128], index: 20, kind: output, shape index: {1}]
  %s21 = inlined_call_operand.hbm [shape: f32[8,128], index: 21, kind: output, shape index: {2}]
  %22 = xla_tuple %s19, %s20, %s21
  %s23 = sld [smem:[#allocation0]]
  $region126: #{forward.1} parent=0
    _
  %s25 = ssub.s32 1, %s23
  %s26 = scalar_select 0, %s25, %s23
  $region1: #{forward.1} parent=0
    #allocation2 [shape = 'u8[32768]{0}', space=vmem, size = 0x8000, scoped, tag = 'input window, operand 1, single buffered']
    #allocation3 [shape = 's32[1]{0}', space=sflag, size = 0x4, scoped, tag = 'scoped memory for forward.1']
    #allocation4 [shape = 's32[1]{0}', space=sflag, size = 0x4, scoped, tag = 'scoped memory for forward.1']
    #allocation5 [shape = 'u8[32768]{0}', space=vmem, size = 0x8000, scoped, tag = 'input window, operand 4, single buffered']
    #allocation6 [shape = 's32[1]{0}', space=sflag, size = 0x4, scoped, tag = 'scoped memory for forward.1']
    #allocation7 [shape = 'u8[32768]{0}', space=vmem, size = 0x8000, scoped, tag = 'input window, operand 6, single buffered']
    #allocation8 [shape = 'u8[32768]{0}', space=vmem, size = 0x8000, scoped, tag = 'input window, operand 9, single buffered']
    #allocation9 [shape = 's32[1]{0}', space=sflag, size = 0x4, scoped, tag = 'scoped memory for forward.1']
    #allocation10 [shape = 'u8[32768]{0}', space=vmem, size = 0x8000, scoped, tag = 'input window, operand 12, single buffered']
    #allocation11 [shape = 'u8[32768]{0}', space=vmem, size = 0x8000, scoped, tag = 'input window, operand 14, single buffered']
    #allocation12 [shape = 's32[1]{0}', space=sflag, size = 0x4, scoped, tag = 'scoped memory for forward.1']
    #allocation13 [shape = 'u8[4096]{0}', space=vmem, size = 0x1000, scoped, tag = 'output window, operand 0, single buffered']
    #allocation14 [shape = 'u8[4096]{0}', space=vmem, size = 0x1000, scoped, tag = 'output window, operand 2, single buffered']
    #allocation15 [shape = 's32[1]{0}', space=sflag, size = 0x4, scoped, tag = 'scoped memory for forward.1']
    %27 = vsyncpa [#allocation3], 0
    %28 = vsyncpa [#allocation6], 0
    %29 = vsyncpa [#allocation9], 0
    %30 = vsyncpa [#allocation12], 0
    %31 = vsyncpa [#allocation4], 0
    %32 = vsyncpa [#allocation15], 0
    // Predicated region
    $region2: #{forward.1} parent=1 // pred_check
      _
    $region3: #{forward.1} parent=1 // pred_check_branch
      %34 = sbr.rel (0) target = $region5
    $region4: #{forward.1} parent=1 // pred_region
      _
    $region5: #{forward.1} parent=1 // pred_fallthru
      _
    // Predicated region
    $region6: #{forward.1} parent=1 // pred_check
      _
    $region7: #{forward.1} parent=1 // pred_check_branch
      %36 = sbr.rel (0) target = $region9
    $region8: #{forward.1} parent=1 // pred_region
      %s38 = ssub.s32 1024, 1024
      %39 = vsyncadd [#allocation3], %s38
      %s40 = sshll.u32 [#allocation2], 4
      %s41 = int_to_ptr.vmem [resolvable:$true] %s40
      %46 = dma.hbm_to_vmem [thread:$0]  %s1, 1024, %s41, [#allocation3], 64, 64, 4
    $region9: #{forward.1} parent=1 // pred_fallthru
      _
    // Predicated region
    $region10: #{forward.1} parent=1 // pred_check
      _
    $region11: #{forward.1} parent=1 // pred_check_branch
      %48 = sbr.rel (0) target = $region13
    $region12: #{forward.1} parent=1 // pred_region
      _
    $region13: #{forward.1} parent=1 // pred_fallthru
      _
    // Predicated region
    $region14: #{forward.1} parent=1 // pred_check
      _
    $region15: #{forward.1} parent=1 // pred_check_branch
      %50 = sbr.rel (0) target = $region17
    $region16: #{forward.1} parent=1 // pred_region
      _
    $region17: #{forward.1} parent=1 // pred_fallthru
      _
    // Predicated region
    $region18: #{forward.1} parent=1 // pred_check
      _
    $region19: #{forward.1} parent=1 // pred_check_branch
      %52 = sbr.rel (0) target = $region21
    $region20: #{forward.1} parent=1 // pred_region
      %s54 = ssub.s32 1024, 1024
      %55 = vsyncadd [#allocation6], %s54
      %s56 = sshll.u32 [#allocation5], 4
      %s57 = int_to_ptr.vmem [resolvable:$true] %s56
      %62 = dma.hbm_to_vmem [thread:$0]  %s4, 1024, %s57, [#allocation6], 64, 64, 4
    $region21: #{forward.1} parent=1 // pred_fallthru
      _
    // Predicated region
    $region22: #{forward.1} parent=1 // pred_check
      _
    $region23: #{forward.1} parent=1 // pred_check_branch
      %64 = sbr.rel (0) target = $region25
    $region24: #{forward.1} parent=1 // pred_region
      _
    $region25: #{forward.1} parent=1 // pred_fallthru
      _
    // Predicated region
    $region26: #{forward.1} parent=1 // pred_check
      _
    $region27: #{forward.1} parent=1 // pred_check_branch
      %66 = sbr.rel (0) target = $region29
    $region28: #{forward.1} parent=1 // pred_region
      %s68 = ssub.s32 1024, 1024
      %69 = vsyncadd [#allocation6], %s68
      %s70 = sshll.u32 [#allocation7], 4
      %s71 = int_to_ptr.vmem [resolvable:$true] %s70
      %76 = dma.hbm_to_vmem [thread:$0]  %s6, 1024, %s71, [#allocation6], 64, 64, 4
    $region29: #{forward.1} parent=1 // pred_fallthru
      _
    // Predicated region
    $region30: #{forward.1} parent=1 // pred_check
      _
    $region31: #{forward.1} parent=1 // pred_check_branch
      %78 = sbr.rel (0) target = $region33
    $region32: #{forward.1} parent=1 // pred_region
      _
    $region33: #{forward.1} parent=1 // pred_fallthru
      _
    // Predicated region
    $region34: #{forward.1} parent=1 // pred_check
      _
    $region35: #{forward.1} parent=1 // pred_check_branch
      %80 = sbr.rel (0) target = $region37
    $region36: #{forward.1} parent=1 // pred_region
      _
    $region37: #{forward.1} parent=1 // pred_fallthru
      _
    // Predicated region
    $region38: #{forward.1} parent=1 // pred_check
      _
    $region39: #{forward.1} parent=1 // pred_check_branch
      %82 = sbr.rel (0) target = $region41
    $region40: #{forward.1} parent=1 // pred_region
      %s84 = ssub.s32 1024, 1024
      %85 = vsyncadd [#allocation9], %s84
      %s86 = sshll.u32 [#allocation8], 4
      %s87 = int_to_ptr.vmem [resolvable:$true] %s86
      %92 = dma.hbm_to_vmem [thread:$0]  %s9, 1024, %s87, [#allocation9], 64, 64, 4
    $region41: #{forward.1} parent=1 // pred_fallthru
      _
    // Predicated region
    $region42: #{forward.1} parent=1 // pred_check
      _
    $region43: #{forward.1} parent=1 // pred_check_branch
      %94 = sbr.rel (0) target = $region45
    $region44: #{forward.1} parent=1 // pred_region
      _
    $region45: #{forward.1} parent=1 // pred_fallthru
      _
    // Predicated region
    $region46: #{forward.1} parent=1 // pred_check
      _
    $region47: #{forward.1} parent=1 // pred_check_branch
      %96 = sbr.rel (0) target = $region49
    $region48: #{forward.1} parent=1 // pred_region
      _
    $region49: #{forward.1} parent=1 // pred_fallthru
      _
    // Predicated region
    $region50: #{forward.1} parent=1 // pred_check
      _
    $region51: #{forward.1} parent=1 // pred_check_branch
      %98 = sbr.rel (0) target = $region53
    $region52: #{forward.1} parent=1 // pred_region
      %s100 = ssub.s32 1024, 1024
      %101 = vsyncadd [#allocation9], %s100
      %s102 = sshll.u32 [#allocation10], 4
      %s103 = int_to_ptr.vmem [resolvable:$true] %s102
      %108 = dma.hbm_to_vmem [thread:$0]  %s12, 1024, %s103, [#allocation9], 64, 64, 4
    $region53: #{forward.1} parent=1 // pred_fallthru
      _
    // Predicated region
    $region54: #{forward.1} parent=1 // pred_check
      _
    $region55: #{forward.1} parent=1 // pred_check_branch
      %110 = sbr.rel (0) target = $region57
    $region56: #{forward.1} parent=1 // pred_region
      _
    $region57: #{forward.1} parent=1 // pred_fallthru
      _
    // Predicated region
    $region58: #{forward.1} parent=1 // pred_check
      _
    $region59: #{forward.1} parent=1 // pred_check_branch
      %112 = sbr.rel (0) target = $region61
    $region60: #{forward.1} parent=1 // pred_region
      %s114 = ssub.s32 1024, 1024
      %115 = vsyncadd [#allocation12], %s114
      %s116 = sshll.u32 [#allocation11], 4
      %s117 = int_to_ptr.vmem [resolvable:$true] %s116
      %122 = dma.hbm_to_vmem [thread:$0]  %s14, 1024, %s117, [#allocation12], 64, 64, 4
    $region61: #{forward.1} parent=1 // pred_fallthru
      _
    // Predicated region
    $region62: #{forward.1} parent=1 // pred_check
      _
    $region63: #{forward.1} parent=1 // pred_check_branch
      %124 = sbr.rel (0) target = $region65
    $region64: #{forward.1} parent=1 // pred_region
      _
    $region65: #{forward.1} parent=1 // pred_fallthru
      _
    // Predicated region
    $region66: #{forward.1} parent=1 // pred_check
      _
    $region67: #{forward.1} parent=1 // pred_check_branch
      %126 = sbr.rel (0) target = $region69
    $region68: #{forward.1} parent=1 // pred_region
      _
    $region69: #{forward.1} parent=1 // pred_fallthru
      _
    // Predicated region
    $region70: #{forward.1} parent=1 // pred_check
      _
    $region71: #{forward.1} parent=1 // pred_check_branch
      %128 = sbr.rel (0) target = $region73
    $region72: #{forward.1} parent=1 // pred_region
      _
    $region73: #{forward.1} parent=1 // pred_fallthru
      _
    // Predicated region
    $region74: #{forward.1} parent=1 // pred_check
      _
    $region75: #{forward.1} parent=1 // pred_check_branch
      %130 = sbr.rel (0) target = $region77
    $region76: #{forward.1} parent=1 // pred_region
      _
    $region77: #{forward.1} parent=1 // pred_fallthru
      _
    // Predicated region
    $region78: #{forward.1} parent=1 // pred_check
      _
    $region79: #{forward.1} parent=1 // pred_check_branch
      %132 = sbr.rel (0) target = $region81
    $region80: #{forward.1} parent=1 // pred_region
      %133 = dma.done [#allocation3], 1024
    $region81: #{forward.1} parent=1 // pred_fallthru
      _
    // Predicated region
    $region82: #{forward.1} parent=1 // pred_check
      _
    $region83: #{forward.1} parent=1 // pred_check_branch
      %135 = sbr.rel (0) target = $region85
    $region84: #{forward.1} parent=1 // pred_region
      %136 = dma.done [#allocation6], 1024
    $region85: #{forward.1} parent=1 // pred_fallthru
      _
    // Predicated region
    $region86: #{forward.1} parent=1 // pred_check
      _
    $region87: #{forward.1} parent=1 // pred_check_branch
      %138 = sbr.rel (0) target = $region89
    $region88: #{forward.1} parent=1 // pred_region
      %139 = dma.done [#allocation6], 1024
    $region89: #{forward.1} parent=1 // pred_fallthru
      _
    // Predicated region
    $region90: #{forward.1} parent=1 // pred_check
      _
    $region91: #{forward.1} parent=1 // pred_check_branch
      %141 = sbr.rel (0) target = $region93
    $region92: #{forward.1} parent=1 // pred_region
      %142 = dma.done [#allocation9], 1024
    $region93: #{forward.1} parent=1 // pred_fallthru
      _
    // Predicated region
    $region94: #{forward.1} parent=1 // pred_check
      _
    $region95: #{forward.1} parent=1 // pred_check_branch
      %144 = sbr.rel (0) target = $region97
    $region96: #{forward.1} parent=1 // pred_region
      %145 = dma.done [#allocation9], 1024
    $region97: #{forward.1} parent=1 // pred_fallthru
      _
    // Predicated region
    $region98: #{forward.1} parent=1 // pred_check
      _
    $region99: #{forward.1} parent=1 // pred_check_branch
      %147 = sbr.rel (0) target = $region101
    $region100: #{forward.1} parent=1 // pred_region
      %148 = dma.done [#allocation12], 1024
    $region101: #{forward.1} parent=1 // pred_fallthru
      _
    %v150 = vlaneseq
    %v151 = vshrl.u32 %v150, 7
    %vm152 = vcmp.lt.s32.totalorder %v151, 8
    %v153 = vsel %vm152, 1, 0
    %v154 = vcvt.s32.f32 %v153
    %v155 = vld [vmem:[%s0] sm:$0xff]
    %v156 = vpack.c.bf16 %v155, %v155
    %v157 = vld [vmem:[#allocation2] sm:$0xf]
    %v158 = vld [vmem:[#allocation2 + $0x4] sm:$0xf]
    %v159 = vld [vmem:[#allocation2 + $0x8] sm:$0xf]
    %v160 = vld [vmem:[#allocation2 + $0xc] sm:$0xf]
    %v161 = vld [vmem:[#allocation2 + $0x10] sm:$0xf]
    %v162 = vld [vmem:[#allocation2 + $0x14] sm:$0xf]
    %v163 = vld [vmem:[#allocation2 + $0x18] sm:$0xf]
    %v164 = vld [vmem:[#allocation2 + $0x1c] sm:$0xf]
    %v165 = vld [vmem:[#allocation2 + $0x20] sm:$0xf]
    %v166 = vld [vmem:[#allocation2 + $0x24] sm:$0xf]
    %v167 = vld [vmem:[#allocation2 + $0x28] sm:$0xf]
    %v168 = vld [vmem:[#allocation2 + $0x2c] sm:$0xf]
    %v169 = vld [vmem:[#allocation2 + $0x30] sm:$0xf]
    %v170 = vld [vmem:[#allocation2 + $0x34] sm:$0xf]
    %v171 = vld [vmem:[#allocation2 + $0x38] sm:$0xf]
    %v172 = vld [vmem:[#allocation2 + $0x3c] sm:$0xf]
    %v189 = vunpack.c.l.b16 %v157
    %v190 = vunpack.c.l.b16 %v158
    %v191 = vunpack.c.l.b16 %v159
    %v192 = vunpack.c.l.b16 %v160
    %v193 = vunpack.c.l.b16 %v161
    %v194 = vunpack.c.l.b16 %v162
    %v195 = vunpack.c.l.b16 %v163
    %v196 = vunpack.c.l.b16 %v164
    %v197 = vunpack.c.l.b16 %v165
    %v198 = vunpack.c.l.b16 %v166
    %v199 = vunpack.c.l.b16 %v167
    %v200 = vunpack.c.l.b16 %v168
    %v201 = vunpack.c.l.b16 %v169
    %v202 = vunpack.c.l.b16 %v170
    %v203 = vunpack.c.l.b16 %v171
    %v204 = vunpack.c.l.b16 %v172
    %v205 = vpack.c.b16 %v190, %v189
    %v206 = vpack.c.b16 %v192, %v191
    %v207 = vpack.c.b16 %v194, %v193
    %v208 = vpack.c.b16 %v196, %v195
    %v209 = vpack.c.b16 %v198, %v197
    %v210 = vpack.c.b16 %v200, %v199
    %v211 = vpack.c.b16 %v202, %v201
    %v212 = vpack.c.b16 %v204, %v203
    %221 = vmatprep.subr.bf16.mxu0 0
    %222 = vmatpush1.bf16.msra.mxu0 %v205
    %223 = vmatprep.subr.bf16.mxu0 0
    %224 = vmatpush1.bf16.msra.mxu0 %v206
    %225 = vmatprep.subr.bf16.mxu0 0
    %226 = vmatpush1.bf16.msra.mxu0 %v207
    %227 = vmatprep.subr.bf16.mxu0 0
    %228 = vmatpush1.bf16.msra.mxu0 %v208
    %229 = vmatprep.subr.bf16.mxu0 0
    %230 = vmatpush1.bf16.msra.mxu0 %v209
    %231 = vmatprep.subr.bf16.mxu0 0
    %232 = vmatpush1.bf16.msra.mxu0 %v210
    %233 = vmatprep.subr.bf16.mxu0 0
    %234 = vmatpush1.bf16.msra.mxu0 %v211
    %235 = vmatprep.subr.bf16.mxu0 0
    %236 = vmatpush1.bf16.msra.mxu0 %v212
    %237 = vmatprep.subr.bf16.mxu0 0
    %238 = vmatpush1.bf16.msra.mxu0 0
    %239 = vmatprep.subr.bf16.mxu0 0
    %240 = vmatpush1.bf16.msra.mxu0 0
    %241 = vmatprep.subr.bf16.mxu0 0
    %242 = vmatpush1.bf16.msra.mxu0 0
    %243 = vmatprep.subr.bf16.mxu0 0
    %244 = vmatpush1.bf16.msra.mxu0 0
    %245 = vmatprep.subr.bf16.mxu0 0
    %246 = vmatpush1.bf16.msra.mxu0 0
    %247 = vmatprep.subr.bf16.mxu0 0
    %248 = vmatpush1.bf16.msra.mxu0 0
    %249 = vmatprep.subr.bf16.mxu0 0
    %250 = vmatpush1.bf16.msra.mxu0 0
    %251 = vmatprep.subr.bf16.mxu0 0
    %252 = vmatpush1.bf16.msra.mxu0 0
    %253 = vmatprep.mubr.bf16.mxu0 0
    %254 = vmatmul.mubr.bf16.gmra.mrb[0].mxu0 %v156
    %v255 = vpop.f32.mrb[0].mxu0
    %v256 = vadd.f32 0.0, %v255
    %v257 = vpop.f32.mrb[0].mxu0
    %v258 = vpop.f32.mrb[0].mxu0
    %v259 = vpop.f32.mrb[0].mxu0
    %260 = vdwg.mxu0
    %v261 = vmul.f32 %v256, %v154
    %v262 = vrot.slane %v261, 4
    %v263 = vadd.f32 %v261, %v262
    %v264 = vrot.slane %v263, 2
    %v265 = vadd.f32 %v263, %v264
    %v266 = vrot.slane %v265, 1
    %v267 = vadd.f32 %v265, %v266
    %v268 = vmul.f32 %v267, 0.125
    %v269 = vsub.f32 %v256, %v268
    %v270 = vmul.f32 %v269, %v269
    %v271 = vmul.f32 %v270, %v154
    %v272 = vrot.slane %v271, 4
    %v273 = vadd.f32 %v271, %v272
    %v274 = vrot.slane %v273, 2
    %v275 = vadd.f32 %v273, %v274
    %v276 = vrot.slane %v275, 1
    %v277 = vadd.f32 %v275, %v276
    %v278 = vmul.f32 %v277, 0.125
    %v279 = vadd.f32 %v278, 1e-05
    %v280 = vrsqrt.pop %v279
    %v281 = vld [vmem:[%s2] sm:$0x1]
    %v282 = vmul.f32 %v280, %v281
    %v283 = vlaneseq
    %v284 = vshrl.u32 %v283, 7
    %v285 = vsub.s32 0, %v284
    %v286 = vrot.slane %v282, %v285
    %v287 = vmul.f32 %v269, %v286
    %v288 = vld [vmem:[%s3] sm:$0x1]
    %v290 = vlaneseq
    %v291 = vshrl.u32 %v290, 7
    %v292 = vsub.s32 0, %v291
    %v293 = vrot.slane %v288, %v292
    %v295 = vadd.f32 %v287, %v293
    %v296 = vmul.f32 %v295, 0.2
    %v297 = vmax.f32 %v295, %v296
    %v298 = vpack.c.bf16 %v297, %v297
    %v299 = vld [vmem:[#allocation5] sm:$0xf]
    %v300 = vld [vmem:[#allocation5 + $0x4] sm:$0xf]
    %v301 = vld [vmem:[#allocation5 + $0x8] sm:$0xf]
    %v302 = vld [vmem:[#allocation5 + $0xc] sm:$0xf]
    %v303 = vld [vmem:[#allocation5 + $0x10] sm:$0xf]
    %v304 = vld [vmem:[#allocation5 + $0x14] sm:$0xf]
    %v305 = vld [vmem:[#allocation5 + $0x18] sm:$0xf]
    %v306 = vld [vmem:[#allocation5 + $0x1c] sm:$0xf]
    %v307 = vld [vmem:[#allocation5 + $0x20] sm:$0xf]
    %v308 = vld [vmem:[#allocation5 + $0x24] sm:$0xf]
    %v309 = vld [vmem:[#allocation5 + $0x28] sm:$0xf]
    %v310 = vld [vmem:[#allocation5 + $0x2c] sm:$0xf]
    %v311 = vld [vmem:[#allocation5 + $0x30] sm:$0xf]
    %v312 = vld [vmem:[#allocation5 + $0x34] sm:$0xf]
    %v313 = vld [vmem:[#allocation5 + $0x38] sm:$0xf]
    %v314 = vld [vmem:[#allocation5 + $0x3c] sm:$0xf]
    %v315 = vld [vmem:[%s5] sm:$0x1]
    %v317 = vlaneseq
    %v318 = vshrl.u32 %v317, 7
    %v319 = vsub.s32 0, %v318
    %v320 = vrot.slane %v315, %v319
    %v338 = vunpack.c.l.b16 %v299
    %v339 = vunpack.c.l.b16 %v300
    %v340 = vunpack.c.l.b16 %v301
    %v341 = vunpack.c.l.b16 %v302
    %v342 = vunpack.c.l.b16 %v303
    %v343 = vunpack.c.l.b16 %v304
    %v344 = vunpack.c.l.b16 %v305
    %v345 = vunpack.c.l.b16 %v306
    %v346 = vunpack.c.l.b16 %v307
    %v347 = vunpack.c.l.b16 %v308
    %v348 = vunpack.c.l.b16 %v309
    %v349 = vunpack.c.l.b16 %v310
    %v350 = vunpack.c.l.b16 %v311
    %v351 = vunpack.c.l.b16 %v312
    %v352 = vunpack.c.l.b16 %v313
    %v353 = vunpack.c.l.b16 %v314
    %v354 = vpack.c.b16 %v339, %v338
    %v355 = vpack.c.b16 %v341, %v340
    %v356 = vpack.c.b16 %v343, %v342
    %v357 = vpack.c.b16 %v345, %v344
    %v358 = vpack.c.b16 %v347, %v346
    %v359 = vpack.c.b16 %v349, %v348
    %v360 = vpack.c.b16 %v351, %v350
    %v361 = vpack.c.b16 %v353, %v352
    %370 = vmatprep.subr.bf16.mxu0 0
    %371 = vmatpush1.bf16.msra.mxu0 %v354
    %372 = vmatprep.subr.bf16.mxu0 0
    %373 = vmatpush1.bf16.msra.mxu0 %v355
    %374 = vmatprep.subr.bf16.mxu0 0
    %375 = vmatpush1.bf16.msra.mxu0 %v356
    %376 = vmatprep.subr.bf16.mxu0 0
    %377 = vmatpush1.bf16.msra.mxu0 %v357
    %378 = vmatprep.subr.bf16.mxu0 0
    %379 = vmatpush1.bf16.msra.mxu0 %v358
    %380 = vmatprep.subr.bf16.mxu0 0
    %381 = vmatpush1.bf16.msra.mxu0 %v359
    %382 = vmatprep.subr.bf16.mxu0 0
    %383 = vmatpush1.bf16.msra.mxu0 %v360
    %384 = vmatprep.subr.bf16.mxu0 0
    %385 = vmatpush1.bf16.msra.mxu0 %v361
    %386 = vmatprep.subr.bf16.mxu0 0
    %387 = vmatpush1.bf16.msra.mxu0 0
    %388 = vmatprep.subr.bf16.mxu0 0
    %389 = vmatpush1.bf16.msra.mxu0 0
    %390 = vmatprep.subr.bf16.mxu0 0
    %391 = vmatpush1.bf16.msra.mxu0 0
    %392 = vmatprep.subr.bf16.mxu0 0
    %393 = vmatpush1.bf16.msra.mxu0 0
    %394 = vmatprep.subr.bf16.mxu0 0
    %395 = vmatpush1.bf16.msra.mxu0 0
    %396 = vmatprep.subr.bf16.mxu0 0
    %397 = vmatpush1.bf16.msra.mxu0 0
    %398 = vmatprep.subr.bf16.mxu0 0
    %399 = vmatpush1.bf16.msra.mxu0 0
    %400 = vmatprep.subr.bf16.mxu0 0
    %401 = vmatpush1.bf16.msra.mxu0 0
    %402 = vmatprep.mubr.bf16.mxu0 0
    %403 = vmatmul.mubr.bf16.gmra.mrb[0].mxu0 %v298
    %v404 = vpop.f32.mrb[0].mxu0
    %v405 = vadd.f32 %v320, %v404
    %v406 = vpop.f32.mrb[0].mxu0
    %v407 = vpop.f32.mrb[0].mxu0
    %v408 = vpop.f32.mrb[0].mxu0
    %409 = vdwg.mxu0
    %410 = vst [vmem:[#allocation13] sm:$0xff] %v405
    %v411 = vpack.c.bf16 %v405, %v405
    %v412 = vld [vmem:[#allocation7] sm:$0xf]
    %v413 = vld [vmem:[#allocation7 + $0x4] sm:$0xf]
    %v414 = vld [vmem:[#allocation7 + $0x8] sm:$0xf]
    %v415 = vld [vmem:[#allocation7 + $0xc] sm:$0xf]
    %v416 = vld [vmem:[#allocation7 + $0x10] sm:$0xf]
    %v417 = vld [vmem:[#allocation7 + $0x14] sm:$0xf]
    %v418 = vld [vmem:[#allocation7 + $0x18] sm:$0xf]
    %v419 = vld [vmem:[#allocation7 + $0x1c] sm:$0xf]
    %v420 = vld [vmem:[#allocation7 + $0x20] sm:$0xf]
    %v421 = vld [vmem:[#allocation7 + $0x24] sm:$0xf]
    %v422 = vld [vmem:[#allocation7 + $0x28] sm:$0xf]
    %v423 = vld [vmem:[#allocation7 + $0x2c] sm:$0xf]
    %v424 = vld [vmem:[#allocation7 + $0x30] sm:$0xf]
    %v425 = vld [vmem:[#allocation7 + $0x34] sm:$0xf]
    %v426 = vld [vmem:[#allocation7 + $0x38] sm:$0xf]
    %v427 = vld [vmem:[#allocation7 + $0x3c] sm:$0xf]
    %v444 = vunpack.c.l.b16 %v412
    %v445 = vunpack.c.l.b16 %v413
    %v446 = vunpack.c.l.b16 %v414
    %v447 = vunpack.c.l.b16 %v415
    %v448 = vunpack.c.l.b16 %v416
    %v449 = vunpack.c.l.b16 %v417
    %v450 = vunpack.c.l.b16 %v418
    %v451 = vunpack.c.l.b16 %v419
    %v452 = vunpack.c.l.b16 %v420
    %v453 = vunpack.c.l.b16 %v421
    %v454 = vunpack.c.l.b16 %v422
    %v455 = vunpack.c.l.b16 %v423
    %v456 = vunpack.c.l.b16 %v424
    %v457 = vunpack.c.l.b16 %v425
    %v458 = vunpack.c.l.b16 %v426
    %v459 = vunpack.c.l.b16 %v427
    %v460 = vpack.c.b16 %v445, %v444
    %v461 = vpack.c.b16 %v447, %v446
    %v462 = vpack.c.b16 %v449, %v448
    %v463 = vpack.c.b16 %v451, %v450
    %v464 = vpack.c.b16 %v453, %v452
    %v465 = vpack.c.b16 %v455, %v454
    %v466 = vpack.c.b16 %v457, %v456
    %v467 = vpack.c.b16 %v459, %v458
    %476 = vmatprep.subr.bf16.mxu0 0
    %477 = vmatpush1.bf16.msra.mxu0 %v460
    %478 = vmatprep.subr.bf16.mxu0 0
    %479 = vmatpush1.bf16.msra.mxu0 %v461
    %480 = vmatprep.subr.bf16.mxu0 0
    %481 = vmatpush1.bf16.msra.mxu0 %v462
    %482 = vmatprep.subr.bf16.mxu0 0
    %483 = vmatpush1.bf16.msra.mxu0 %v463
    %484 = vmatprep.subr.bf16.mxu0 0
    %485 = vmatpush1.bf16.msra.mxu0 %v464
    %486 = vmatprep.subr.bf16.mxu0 0
    %487 = vmatpush1.bf16.msra.mxu0 %v465
    %488 = vmatprep.subr.bf16.mxu0 0
    %489 = vmatpush1.bf16.msra.mxu0 %v466
    %490 = vmatprep.subr.bf16.mxu0 0
    %491 = vmatpush1.bf16.msra.mxu0 %v467
    %492 = vmatprep.subr.bf16.mxu0 0
    %493 = vmatpush1.bf16.msra.mxu0 0
    %494 = vmatprep.subr.bf16.mxu0 0
    %495 = vmatpush1.bf16.msra.mxu0 0
    %496 = vmatprep.subr.bf16.mxu0 0
    %497 = vmatpush1.bf16.msra.mxu0 0
    %498 = vmatprep.subr.bf16.mxu0 0
    %499 = vmatpush1.bf16.msra.mxu0 0
    %500 = vmatprep.subr.bf16.mxu0 0
    %501 = vmatpush1.bf16.msra.mxu0 0
    %502 = vmatprep.subr.bf16.mxu0 0
    %503 = vmatpush1.bf16.msra.mxu0 0
    %504 = vmatprep.subr.bf16.mxu0 0
    %505 = vmatpush1.bf16.msra.mxu0 0
    %506 = vmatprep.subr.bf16.mxu0 0
    %507 = vmatpush1.bf16.msra.mxu0 0
    %508 = vmatprep.mubr.bf16.mxu0 0
    %509 = vmatmul.mubr.bf16.gmra.mrb[0].mxu0 %v411
    %v510 = vpop.f32.mrb[0].mxu0
    %v511 = vadd.f32 0.0, %v510
    %v512 = vpop.f32.mrb[0].mxu0
    %v513 = vpop.f32.mrb[0].mxu0
    %v514 = vpop.f32.mrb[0].mxu0
    %515 = vdwg.mxu0
    %v516 = vmul.f32 %v511, %v154
    %v517 = vrot.slane %v516, 4
    %v518 = vadd.f32 %v516, %v517
    %v519 = vrot.slane %v518, 2
    %v520 = vadd.f32 %v518, %v519
    %v521 = vrot.slane %v520, 1
    %v522 = vadd.f32 %v520, %v521
    %v523 = vmul.f32 %v522, 0.125
    %v524 = vsub.f32 %v511, %v523
    %v525 = vmul.f32 %v524, %v524
    %v526 = vmul.f32 %v525, %v154
    %v527 = vrot.slane %v526, 4
    %v528 = vadd.f32 %v526, %v527
    %v529 = vrot.slane %v528, 2
    %v530 = vadd.f32 %v528, %v529
    %v531 = vrot.slane %v530, 1
    %v532 = vadd.f32 %v530, %v531
    %v533 = vmul.f32 %v532, 0.125
    %v534 = vadd.f32 %v533, 1e-05
    %v535 = vrsqrt.pop %v534
    %v536 = vld [vmem:[%s7] sm:$0x1]
    %v537 = vmul.f32 %v535, %v536
    %v538 = vlaneseq
    %v539 = vshrl.u32 %v538, 7
    %v540 = vsub.s32 0, %v539
    %v541 = vrot.slane %v537, %v540
    %v542 = vmul.f32 %v524, %v541
    %v543 = vld [vmem:[%s8] sm:$0x1]
    %v545 = vlaneseq
    %v546 = vshrl.u32 %v545, 7
    %v547 = vsub.s32 0, %v546
    %v548 = vrot.slane %v543, %v547
    %v550 = vadd.f32 %v542, %v548
    %v551 = vmul.f32 %v550, 0.2
    %v552 = vmax.f32 %v550, %v551
    %v553 = vpack.c.bf16 %v552, %v552
    %v554 = vld [vmem:[#allocation8] sm:$0xf]
    %v555 = vld [vmem:[#allocation8 + $0x4] sm:$0xf]
    %v556 = vld [vmem:[#allocation8 + $0x8] sm:$0xf]
    %v557 = vld [vmem:[#allocation8 + $0xc] sm:$0xf]
    %v558 = vld [vmem:[#allocation8 + $0x10] sm:$0xf]
    %v559 = vld [vmem:[#allocation8 + $0x14] sm:$0xf]
    %v560 = vld [vmem:[#allocation8 + $0x18] sm:$0xf]
    %v561 = vld [vmem:[#allocation8 + $0x1c] sm:$0xf]
    %v562 = vld [vmem:[#allocation8 + $0x20] sm:$0xf]
    %v563 = vld [vmem:[#allocation8 + $0x24] sm:$0xf]
    %v564 = vld [vmem:[#allocation8 + $0x28] sm:$0xf]
    %v565 = vld [vmem:[#allocation8 + $0x2c] sm:$0xf]
    %v566 = vld [vmem:[#allocation8 + $0x30] sm:$0xf]
    %v567 = vld [vmem:[#allocation8 + $0x34] sm:$0xf]
    %v568 = vld [vmem:[#allocation8 + $0x38] sm:$0xf]
    %v569 = vld [vmem:[#allocation8 + $0x3c] sm:$0xf]
    %v586 = vunpack.c.l.b16 %v554
    %v587 = vunpack.c.l.b16 %v555
    %v588 = vunpack.c.l.b16 %v556
    %v589 = vunpack.c.l.b16 %v557
    %v590 = vunpack.c.l.b16 %v558
    %v591 = vunpack.c.l.b16 %v559
    %v592 = vunpack.c.l.b16 %v560
    %v593 = vunpack.c.l.b16 %v561
    %v594 = vunpack.c.l.b16 %v562
    %v595 = vunpack.c.l.b16 %v563
    %v596 = vunpack.c.l.b16 %v564
    %v597 = vunpack.c.l.b16 %v565
    %v598 = vunpack.c.l.b16 %v566
    %v599 = vunpack.c.l.b16 %v567
    %v600 = vunpack.c.l.b16 %v568
    %v601 = vunpack.c.l.b16 %v569
    %v602 = vpack.c.b16 %v587, %v586
    %v603 = vpack.c.b16 %v589, %v588
    %v604 = vpack.c.b16 %v591, %v590
    %v605 = vpack.c.b16 %v593, %v592
    %v606 = vpack.c.b16 %v595, %v594
    %v607 = vpack.c.b16 %v597, %v596
    %v608 = vpack.c.b16 %v599, %v598
    %v609 = vpack.c.b16 %v601, %v600
    %618 = vmatprep.subr.bf16.mxu0 0
    %619 = vmatpush1.bf16.msra.mxu0 %v602
    %620 = vmatprep.subr.bf16.mxu0 0
    %621 = vmatpush1.bf16.msra.mxu0 %v603
    %622 = vmatprep.subr.bf16.mxu0 0
    %623 = vmatpush1.bf16.msra.mxu0 %v604
    %624 = vmatprep.subr.bf16.mxu0 0
    %625 = vmatpush1.bf16.msra.mxu0 %v605
    %626 = vmatprep.subr.bf16.mxu0 0
    %627 = vmatpush1.bf16.msra.mxu0 %v606
    %628 = vmatprep.subr.bf16.mxu0 0
    %629 = vmatpush1.bf16.msra.mxu0 %v607
    %630 = vmatprep.subr.bf16.mxu0 0
    %631 = vmatpush1.bf16.msra.mxu0 %v608
    %632 = vmatprep.subr.bf16.mxu0 0
    %633 = vmatpush1.bf16.msra.mxu0 %v609
    %634 = vmatprep.subr.bf16.mxu0 0
    %635 = vmatpush1.bf16.msra.mxu0 0
    %636 = vmatprep.subr.bf16.mxu0 0
    %637 = vmatpush1.bf16.msra.mxu0 0
    %638 = vmatprep.subr.bf16.mxu0 0
    %639 = vmatpush1.bf16.msra.mxu0 0
    %640 = vmatprep.subr.bf16.mxu0 0
    %641 = vmatpush1.bf16.msra.mxu0 0
    %642 = vmatprep.subr.bf16.mxu0 0
    %643 = vmatpush1.bf16.msra.mxu0 0
    %644 = vmatprep.subr.bf16.mxu0 0
    %645 = vmatpush1.bf16.msra.mxu0 0
    %646 = vmatprep.subr.bf16.mxu0 0
    %647 = vmatpush1.bf16.msra.mxu0 0
    %648 = vmatprep.subr.bf16.mxu0 0
    %649 = vmatpush1.bf16.msra.mxu0 0
    %650 = vmatprep.mubr.bf16.mxu0 0
    %651 = vmatmul.mubr.bf16.gmra.mrb[0].mxu0 %v553
    %v652 = vpop.f32.mrb[0].mxu0
    %v653 = vadd.f32 0.0, %v652
    %v654 = vpop.f32.mrb[0].mxu0
    %v655 = vpop.f32.mrb[0].mxu0
    %v656 = vpop.f32.mrb[0].mxu0
    %657 = vdwg.mxu0
    %v658 = vmul.f32 %v653, %v154
    %v659 = vrot.slane %v658, 4
    %v660 = vadd.f32 %v658, %v659
    %v661 = vrot.slane %v660, 2
    %v662 = vadd.f32 %v660, %v661
    %v663 = vrot.slane %v662, 1
    %v664 = vadd.f32 %v662, %v663
    %v665 = vmul.f32 %v664, 0.125
    %v666 = vsub.f32 %v653, %v665
    %v667 = vmul.f32 %v666, %v666
    %v668 = vmul.f32 %v667, %v154
    %v669 = vrot.slane %v668, 4
    %v670 = vadd.f32 %v668, %v669
    %v671 = vrot.slane %v670, 2
    %v672 = vadd.f32 %v670, %v671
    %v673 = vrot.slane %v672, 1
    %v674 = vadd.f32 %v672, %v673
    %v675 = vmul.f32 %v674, 0.125
    %v676 = vadd.f32 %v675, 1e-05
    %v677 = vrsqrt.pop %v676
    %v678 = vld [vmem:[%s10] sm:$0x1]
    %v679 = vmul.f32 %v677, %v678
    %v680 = vlaneseq
    %v681 = vshrl.u32 %v680, 7
    %v682 = vsub.s32 0, %v681
    %v683 = vrot.slane %v679, %v682
    %v684 = vmul.f32 %v666, %v683
    %v685 = vld [vmem:[%s11] sm:$0x1]
    %v687 = vlaneseq
    %v688 = vshrl.u32 %v687, 7
    %v689 = vsub.s32 0, %v688
    %v690 = vrot.slane %v685, %v689
    %v692 = vadd.f32 %v684, %v690
    %v693 = vmul.f32 %v692, 0.2
    %v694 = vmax.f32 %v692, %v693
    %v695 = vpack.c.bf16 %v694, %v694
    %v696 = vld [vmem:[#allocation10] sm:$0xf]
    %v697 = vld [vmem:[#allocation10 + $0x4] sm:$0xf]
    %v698 = vld [vmem:[#allocation10 + $0x8] sm:$0xf]
    %v699 = vld [vmem:[#allocation10 + $0xc] sm:$0xf]
    %v700 = vld [vmem:[#allocation10 + $0x10] sm:$0xf]
    %v701 = vld [vmem:[#allocation10 + $0x14] sm:$0xf]
    %v702 = vld [vmem:[#allocation10 + $0x18] sm:$0xf]
    %v703 = vld [vmem:[#allocation10 + $0x1c] sm:$0xf]
    %v704 = vld [vmem:[#allocation10 + $0x20] sm:$0xf]
    %v705 = vld [vmem:[#allocation10 + $0x24] sm:$0xf]
    %v706 = vld [vmem:[#allocation10 + $0x28] sm:$0xf]
    %v707 = vld [vmem:[#allocation10 + $0x2c] sm:$0xf]
    %v708 = vld [vmem:[#allocation10 + $0x30] sm:$0xf]
    %v709 = vld [vmem:[#allocation10 + $0x34] sm:$0xf]
    %v710 = vld [vmem:[#allocation10 + $0x38] sm:$0xf]
    %v711 = vld [vmem:[#allocation10 + $0x3c] sm:$0xf]
    %v712 = vld [vmem:[%s13] sm:$0x1]
    %v714 = vlaneseq
    %v715 = vshrl.u32 %v714, 7
    %v716 = vsub.s32 0, %v715
    %v717 = vrot.slane %v712, %v716
    %v735 = vunpack.c.l.b16 %v696
    %v736 = vunpack.c.l.b16 %v697
    %v737 = vunpack.c.l.b16 %v698
    %v738 = vunpack.c.l.b16 %v699
    %v739 = vunpack.c.l.b16 %v700
    %v740 = vunpack.c.l.b16 %v701
    %v741 = vunpack.c.l.b16 %v702
    %v742 = vunpack.c.l.b16 %v703
    %v743 = vunpack.c.l.b16 %v704
    %v744 = vunpack.c.l.b16 %v705
    %v745 = vunpack.c.l.b16 %v706
    %v746 = vunpack.c.l.b16 %v707
    %v747 = vunpack.c.l.b16 %v708
    %v748 = vunpack.c.l.b16 %v709
    %v749 = vunpack.c.l.b16 %v710
    %v750 = vunpack.c.l.b16 %v711
    %v751 = vpack.c.b16 %v736, %v735
    %v752 = vpack.c.b16 %v738, %v737
    %v753 = vpack.c.b16 %v740, %v739
    %v754 = vpack.c.b16 %v742, %v741
    %v755 = vpack.c.b16 %v744, %v743
    %v756 = vpack.c.b16 %v746, %v745
    %v757 = vpack.c.b16 %v748, %v747
    %v758 = vpack.c.b16 %v750, %v749
    %767 = vmatprep.subr.bf16.mxu0 0
    %768 = vmatpush1.bf16.msra.mxu0 %v751
    %769 = vmatprep.subr.bf16.mxu0 0
    %770 = vmatpush1.bf16.msra.mxu0 %v752
    %771 = vmatprep.subr.bf16.mxu0 0
    %772 = vmatpush1.bf16.msra.mxu0 %v753
    %773 = vmatprep.subr.bf16.mxu0 0
    %774 = vmatpush1.bf16.msra.mxu0 %v754
    %775 = vmatprep.subr.bf16.mxu0 0
    %776 = vmatpush1.bf16.msra.mxu0 %v755
    %777 = vmatprep.subr.bf16.mxu0 0
    %778 = vmatpush1.bf16.msra.mxu0 %v756
    %779 = vmatprep.subr.bf16.mxu0 0
    %780 = vmatpush1.bf16.msra.mxu0 %v757
    %781 = vmatprep.subr.bf16.mxu0 0
    %782 = vmatpush1.bf16.msra.mxu0 %v758
    %783 = vmatprep.subr.bf16.mxu0 0
    %784 = vmatpush1.bf16.msra.mxu0 0
    %785 = vmatprep.subr.bf16.mxu0 0
    %786 = vmatpush1.bf16.msra.mxu0 0
    %787 = vmatprep.subr.bf16.mxu0 0
    %788 = vmatpush1.bf16.msra.mxu0 0
    %789 = vmatprep.subr.bf16.mxu0 0
    %790 = vmatpush1.bf16.msra.mxu0 0
    %791 = vmatprep.subr.bf16.mxu0 0
    %792 = vmatpush1.bf16.msra.mxu0 0
    %793 = vmatprep.subr.bf16.mxu0 0
    %794 = vmatpush1.bf16.msra.mxu0 0
    %795 = vmatprep.subr.bf16.mxu0 0
    %796 = vmatpush1.bf16.msra.mxu0 0
    %797 = vmatprep.subr.bf16.mxu0 0
    %798 = vmatpush1.bf16.msra.mxu0 0
    %799 = vmatprep.mubr.bf16.mxu0 0
    %800 = vmatmul.mubr.bf16.gmra.mrb[0].mxu0 %v695
    %v801 = vpop.f32.mrb[0].mxu0
    %v802 = vadd.f32 %v717, %v801
    %v803 = vpop.f32.mrb[0].mxu0
    %v804 = vpop.f32.mrb[0].mxu0
    %v805 = vpop.f32.mrb[0].mxu0
    %806 = vdwg.mxu0
    %807 = vst [vmem:[%s20] sm:$0xff] %v802
    %v808 = vld [vmem:[#allocation11] sm:$0xf]
    %v809 = vld [vmem:[#allocation11 + $0x4] sm:$0xf]
    %v810 = vld [vmem:[#allocation11 + $0x8] sm:$0xf]
    %v811 = vld [vmem:[#allocation11 + $0xc] sm:$0xf]
    %v812 = vld [vmem:[#allocation11 + $0x10] sm:$0xf]
    %v813 = vld [vmem:[#allocation11 + $0x14] sm:$0xf]
    %v814 = vld [vmem:[#allocation11 + $0x18] sm:$0xf]
    %v815 = vld [vmem:[#allocation11 + $0x1c] sm:$0xf]
    %v816 = vld [vmem:[#allocation11 + $0x20] sm:$0xf]
    %v817 = vld [vmem:[#allocation11 + $0x24] sm:$0xf]
    %v818 = vld [vmem:[#allocation11 + $0x28] sm:$0xf]
    %v819 = vld [vmem:[#allocation11 + $0x2c] sm:$0xf]
    %v820 = vld [vmem:[#allocation11 + $0x30] sm:$0xf]
    %v821 = vld [vmem:[#allocation11 + $0x34] sm:$0xf]
    %v822 = vld [vmem:[#allocation11 + $0x38] sm:$0xf]
    %v823 = vld [vmem:[#allocation11 + $0x3c] sm:$0xf]
    %v840 = vunpack.c.l.b16 %v808
    %v841 = vunpack.c.l.b16 %v809
    %v842 = vunpack.c.l.b16 %v810
    %v843 = vunpack.c.l.b16 %v811
    %v844 = vunpack.c.l.b16 %v812
    %v845 = vunpack.c.l.b16 %v813
    %v846 = vunpack.c.l.b16 %v814
    %v847 = vunpack.c.l.b16 %v815
    %v848 = vunpack.c.l.b16 %v816
    %v849 = vunpack.c.l.b16 %v817
    %v850 = vunpack.c.l.b16 %v818
    %v851 = vunpack.c.l.b16 %v819
    %v852 = vunpack.c.l.b16 %v820
    %v853 = vunpack.c.l.b16 %v821
    %v854 = vunpack.c.l.b16 %v822
    %v855 = vunpack.c.l.b16 %v823
    %v856 = vpack.c.b16 %v841, %v840
    %v857 = vpack.c.b16 %v843, %v842
    %v858 = vpack.c.b16 %v845, %v844
    %v859 = vpack.c.b16 %v847, %v846
    %v860 = vpack.c.b16 %v849, %v848
    %v861 = vpack.c.b16 %v851, %v850
    %v862 = vpack.c.b16 %v853, %v852
    %v863 = vpack.c.b16 %v855, %v854
    %872 = vmatprep.subr.bf16.mxu0 0
    %873 = vmatpush1.bf16.msra.mxu0 %v856
    %874 = vmatprep.subr.bf16.mxu0 0
    %875 = vmatpush1.bf16.msra.mxu0 %v857
    %876 = vmatprep.subr.bf16.mxu0 0
    %877 = vmatpush1.bf16.msra.mxu0 %v858
    %878 = vmatprep.subr.bf16.mxu0 0
    %879 = vmatpush1.bf16.msra.mxu0 %v859
    %880 = vmatprep.subr.bf16.mxu0 0
    %881 = vmatpush1.bf16.msra.mxu0 %v860
    %882 = vmatprep.subr.bf16.mxu0 0
    %883 = vmatpush1.bf16.msra.mxu0 %v861
    %884 = vmatprep.subr.bf16.mxu0 0
    %885 = vmatpush1.bf16.msra.mxu0 %v862
    %886 = vmatprep.subr.bf16.mxu0 0
    %887 = vmatpush1.bf16.msra.mxu0 %v863
    %888 = vmatprep.subr.bf16.mxu0 0
    %889 = vmatpush1.bf16.msra.mxu0 0
    %890 = vmatprep.subr.bf16.mxu0 0
    %891 = vmatpush1.bf16.msra.mxu0 0
    %892 = vmatprep.subr.bf16.mxu0 0
    %893 = vmatpush1.bf16.msra.mxu0 0
    %894 = vmatprep.subr.bf16.mxu0 0
    %895 = vmatpush1.bf16.msra.mxu0 0
    %896 = vmatprep.subr.bf16.mxu0 0
    %897 = vmatpush1.bf16.msra.mxu0 0
    %898 = vmatprep.subr.bf16.mxu0 0
    %899 = vmatpush1.bf16.msra.mxu0 0
    %900 = vmatprep.subr.bf16.mxu0 0
    %901 = vmatpush1.bf16.msra.mxu0 0
    %902 = vmatprep.subr.bf16.mxu0 0
    %903 = vmatpush1.bf16.msra.mxu0 0
    %904 = vmatprep.mubr.bf16.mxu0 0
    %905 = vmatmul.mubr.bf16.gmra.mrb[0].mxu0 %v156
    %v906 = vpop.f32.mrb[0].mxu0
    %v907 = vadd.f32 0.0, %v906
    %v908 = vpop.f32.mrb[0].mxu0
    %v909 = vpop.f32.mrb[0].mxu0
    %v910 = vpop.f32.mrb[0].mxu0
    %911 = vdwg.mxu0
    %v912 = vmul.f32 %v907, %v154
    %v913 = vrot.slane %v912, 4
    %v914 = vadd.f32 %v912, %v913
    %v915 = vrot.slane %v914, 2
    %v916 = vadd.f32 %v914, %v915
    %v917 = vrot.slane %v916, 1
    %v918 = vadd.f32 %v916, %v917
    %v919 = vmul.f32 %v918, 0.125
    %v920 = vsub.f32 %v907, %v919
    %v921 = vmul.f32 %v920, %v920
    %v922 = vmul.f32 %v921, %v154
    %v923 = vrot.slane %v922, 4
    %v924 = vadd.f32 %v922, %v923
    %v925 = vrot.slane %v924, 2
    %v926 = vadd.f32 %v924, %v925
    %v927 = vrot.slane %v926, 1
    %v928 = vadd.f32 %v926, %v927
    %v929 = vmul.f32 %v928, 0.125
    %v930 = vadd.f32 %v929, 1e-05
    %v931 = vrsqrt.pop %v930
    %v932 = vld [vmem:[%s15] sm:$0x1]
    %v933 = vmul.f32 %v931, %v932
    %v934 = vlaneseq
    %v935 = vshrl.u32 %v934, 7
    %v936 = vsub.s32 0, %v935
    %v937 = vrot.slane %v933, %v936
    %v938 = vmul.f32 %v920, %v937
    %v939 = vld [vmem:[%s16] sm:$0x1]
    %v941 = vlaneseq
    %v942 = vshrl.u32 %v941, 7
    %v943 = vsub.s32 0, %v942
    %v944 = vrot.slane %v939, %v943
    %v946 = vadd.f32 %v938, %v944
    %v947 = vmul.f32 %v946, 0.2
    %v948 = vmax.f32 %v946, %v947
    %v949 = vpack.c.bf16 %v948, %v948
    %v950 = vld [vmem:[%s17] sm:$0xf]
    %v951 = vld [vmem:[%s17 + $0x4] sm:$0xf]
    %v952 = vld [vmem:[%s17 + $0x8] sm:$0xf]
    %v953 = vld [vmem:[%s17 + $0xc] sm:$0xf]
    %v954 = vld [vmem:[%s17 + $0x10] sm:$0xf]
    %v955 = vld [vmem:[%s17 + $0x14] sm:$0xf]
    %v956 = vld [vmem:[%s17 + $0x18] sm:$0xf]
    %v957 = vld [vmem:[%s17 + $0x1c] sm:$0xf]
    %v958 = vld [vmem:[%s17 + $0x20] sm:$0xf]
    %v959 = vld [vmem:[%s17 + $0x24] sm:$0xf]
    %v960 = vld [vmem:[%s17 + $0x28] sm:$0xf]
    %v961 = vld [vmem:[%s17 + $0x2c] sm:$0xf]
    %v962 = vld [vmem:[%s17 + $0x30] sm:$0xf]
    %v963 = vld [vmem:[%s17 + $0x34] sm:$0xf]
    %v964 = vld [vmem:[%s17 + $0x38] sm:$0xf]
    %v965 = vld [vmem:[%s17 + $0x3c] sm:$0xf]
    %v966 = vld [vmem:[%s18] sm:$0x1]
    %v968 = vlaneseq
    %v969 = vshrl.u32 %v968, 7
    %v970 = vsub.s32 0, %v969
    %v971 = vrot.slane %v966, %v970
    %v989 = vunpack.c.l.b16 %v950
    %v990 = vunpack.c.l.b16 %v951
    %v991 = vunpack.c.l.b16 %v952
    %v992 = vunpack.c.l.b16 %v953
    %v993 = vunpack.c.l.b16 %v954
    %v994 = vunpack.c.l.b16 %v955
    %v995 = vunpack.c.l.b16 %v956
    %v996 = vunpack.c.l.b16 %v957
    %v997 = vunpack.c.l.b16 %v958
    %v998 = vunpack.c.l.b16 %v959
    %v999 = vunpack.c.l.b16 %v960
    %v1000 = vunpack.c.l.b16 %v961
    %v1001 = vunpack.c.l.b16 %v962
    %v1002 = vunpack.c.l.b16 %v963
    %v1003 = vunpack.c.l.b16 %v964
    %v1004 = vunpack.c.l.b16 %v965
    %v1005 = vpack.c.b16 %v990, %v989
    %v1006 = vpack.c.b16 %v992, %v991
    %v1007 = vpack.c.b16 %v994, %v993
    %v1008 = vpack.c.b16 %v996, %v995
    %v1009 = vpack.c.b16 %v998, %v997
    %v1010 = vpack.c.b16 %v1000, %v999
    %v1011 = vpack.c.b16 %v1002, %v1001
    %v1012 = vpack.c.b16 %v1004, %v1003
    %1021 = vmatprep.subr.bf16.mxu0 0
    %1022 = vmatpush1.bf16.msra.mxu0 %v1005
    %1023 = vmatprep.subr.bf16.mxu0 0
    %1024 = vmatpush1.bf16.msra.mxu0 %v1006
    %1025 = vmatprep.subr.bf16.mxu0 0
    %1026 = vmatpush1.bf16.msra.mxu0 %v1007
    %1027 = vmatprep.subr.bf16.mxu0 0
    %1028 = vmatpush1.bf16.msra.mxu0 %v1008
    %1029 = vmatprep.subr.bf16.mxu0 0
    %1030 = vmatpush1.bf16.msra.mxu0 %v1009
    %1031 = vmatprep.subr.bf16.mxu0 0
    %1032 = vmatpush1.bf16.msra.mxu0 %v1010
    %1033 = vmatprep.subr.bf16.mxu0 0
    %1034 = vmatpush1.bf16.msra.mxu0 %v1011
    %1035 = vmatprep.subr.bf16.mxu0 0
    %1036 = vmatpush1.bf16.msra.mxu0 %v1012
    %1037 = vmatprep.subr.bf16.mxu0 0
    %1038 = vmatpush1.bf16.msra.mxu0 0
    %1039 = vmatprep.subr.bf16.mxu0 0
    %1040 = vmatpush1.bf16.msra.mxu0 0
    %1041 = vmatprep.subr.bf16.mxu0 0
    %1042 = vmatpush1.bf16.msra.mxu0 0
    %1043 = vmatprep.subr.bf16.mxu0 0
    %1044 = vmatpush1.bf16.msra.mxu0 0
    %1045 = vmatprep.subr.bf16.mxu0 0
    %1046 = vmatpush1.bf16.msra.mxu0 0
    %1047 = vmatprep.subr.bf16.mxu0 0
    %1048 = vmatpush1.bf16.msra.mxu0 0
    %1049 = vmatprep.subr.bf16.mxu0 0
    %1050 = vmatpush1.bf16.msra.mxu0 0
    %1051 = vmatprep.subr.bf16.mxu0 0
    %1052 = vmatpush1.bf16.msra.mxu0 0
    %1053 = vmatprep.mubr.bf16.mxu0 0
    %1054 = vmatmul.mubr.bf16.gmra.mrb[0].mxu0 %v949
    %v1055 = vpop.f32.mrb[0].mxu0
    %v1056 = vadd.f32 %v971, %v1055
    %v1057 = vpop.f32.mrb[0].mxu0
    %v1058 = vpop.f32.mrb[0].mxu0
    %v1059 = vpop.f32.mrb[0].mxu0
    %1060 = vdwg.mxu0
    %1061 = vst [vmem:[#allocation14] sm:$0xff] %v1056
    // Predicated region
    $region102: #{forward.1} parent=1 // pred_check
      _
    $region103: #{forward.1} parent=1 // pred_check_branch
      %1063 = sbr.rel (0) target = $region105
    $region104: #{forward.1} parent=1 // pred_region
      %s1065 = ssub.s32 128, 128
      %1066 = vsyncadd [#allocation4], %s1065
      %s1068 = sshll.u32 [#allocation13], 4
      %s1069 = int_to_ptr.vmem [resolvable:$true] %s1068
      %1071 = dma.vmem_to_hbm [thread:$0]  %s1069, 128, %s19, [#allocation4]
    $region105: #{forward.1} parent=1 // pred_fallthru
      _
    // Predicated region
    $region106: #{forward.1} parent=1 // pred_check
      _
    $region107: #{forward.1} parent=1 // pred_check_branch
      %1073 = sbr.rel (0) target = $region109
    $region108: #{forward.1} parent=1 // pred_region
      _
    $region109: #{forward.1} parent=1 // pred_fallthru
      _
    // Predicated region
    $region110: #{forward.1} parent=1 // pred_check
      _
    $region111: #{forward.1} parent=1 // pred_check_branch
      %1075 = sbr.rel (0) target = $region113
    $region112: #{forward.1} parent=1 // pred_region
      %s1077 = ssub.s32 128, 128
      %1078 = vsyncadd [#allocation15], %s1077
      %s1080 = sshll.u32 [#allocation14], 4
      %s1081 = int_to_ptr.vmem [resolvable:$true] %s1080
      %1083 = dma.vmem_to_hbm [thread:$0]  %s1081, 128, %s21, [#allocation15]
    $region113: #{forward.1} parent=1 // pred_fallthru
      _
    // Predicated region
    $region114: #{forward.1} parent=1 // pred_check
      _
    $region115: #{forward.1} parent=1 // pred_check_branch
      %1085 = sbr.rel (0) target = $region117
    $region116: #{forward.1} parent=1 // pred_region
      %1086 = dma.done [#allocation4], 128
    $region117: #{forward.1} parent=1 // pred_fallthru
      _
    // Predicated region
    $region118: #{forward.1} parent=1 // pred_check
      _
    $region119: #{forward.1} parent=1 // pred_check_branch
      %1088 = sbr.rel (0) target = $region121
    $region120: #{forward.1} parent=1 // pred_region
      _
    $region121: #{forward.1} parent=1 // pred_fallthru
      _
    // Predicated region
    $region122: #{forward.1} parent=1 // pred_check
      _
    $region123: #{forward.1} parent=1 // pred_check_branch
      %1090 = sbr.rel (0) target = $region125
    $region124: #{forward.1} parent=1 // pred_region
      %1091 = dma.done [#allocation15], 128
    $region125: #{forward.1} parent=1 // pred_fallthru
      _
    %1092 = vsyncpa [#allocation3], 1
    %1093 = vsyncpa [#allocation6], 1
    %1094 = vsyncpa [#allocation9], 1
    %1095 = vsyncpa [#allocation12], 1
    %1096 = vsyncpa [#allocation4], 1
    %1097 = vsyncpa [#allocation15], 1

</llo_original>
